<compile_context>
chip_gen: v7x
topology: tpu7x:2x2x1
jax: 0.10.0
libtpu: 0.0.40
codegen_flags: <defaults>
</compile_context>

<pallas_src>
import jax
import jax.numpy as jnp
from jax import lax
from jax.experimental import pallas as pl
from jax.experimental.pallas import tpu as pltpu

LANES = 128
TB_MAX = 8  # samples per conv grid step (keeps blocks < ~11 MB VMEM on all gens)

_COMPILER_PARAMS = pltpu.CompilerParams(
    dimension_semantics=("parallel",),
    vmem_limit_bytes=32 * 1024 * 1024,
)


# ----------------------------------------------------------------------------
# Pallas kernels
# ----------------------------------------------------------------------------
def _conv_relu_pool_kernel(p_ref, w_ref, b_ref, o_ref):
    # p_ref: (1, 4, M, K)  pool-grouped im2col patches for TB samples (M = TB*P)
    # w_ref: (K, 128)      weight slab, Cout zero-padded to 128 lanes
    # b_ref: (1, 128)      bias, zero-padded
    # o_ref: (1, M, Cout)  lane-compact pooled activation (Cout = 8 or 16)
    w = w_ref[...]
    acc = jnp.dot(p_ref[0, 0], w, preferred_element_type=jnp.float32)
    for j in range(1, 4):
        # running max keeps only one extra live accumulator (review: no tree-max)
        acc = jnp.maximum(
            acc, jnp.dot(p_ref[0, j], w, preferred_element_type=jnp.float32))
    # maxpool(relu(conv + b)) == relu(max_j(conv_j) + b)  (shared b, relu monotone)
    cout = o_ref.shape[-1]
    o_ref[0] = jnp.maximum(acc + b_ref[...], 0.0)[:, :cout]


def _fc_fused_kernel(x_ref, w1_ref, b1_ref, w2_ref, b2_ref, w3_ref, b3_ref,
                     o_ref):
    # x_ref: (TM, 400); weights lane-dense / zero-padded to 128 columns.
    h = jnp.dot(x_ref[...], w1_ref[...], preferred_element_type=jnp.float32)
    h = jnp.maximum(h + b1_ref[...], 0.0)
    h = jnp.dot(h, w2_ref[...], preferred_element_type=jnp.float32)
    h = jnp.maximum(h + b2_ref[...], 0.0)
    h = jnp.dot(h, w3_ref[...], preferred_element_type=jnp.float32)
    o_ref[...] = (h + b3_ref[...]).astype(o_ref.dtype)


# ----------------------------------------------------------------------------
# pallas_call wrappers
# ----------------------------------------------------------------------------
def conv_relu_pool(patches, wmat, bias, cout):
    """patches (Nb, 4, TB*P, K) -> pooled activation (Nb, TB*P, cout)."""
    nb, _, m, k = patches.shape
    return pl.pallas_call(
        _conv_relu_pool_kernel,
        out_shape=jax.ShapeDtypeStruct((nb, m, cout), jnp.float32),
        grid=(nb,),
        in_specs=[
            pl.BlockSpec((1, 4, m, k), lambda i: (i, 0, 0, 0)),
            pl.BlockSpec((k, LANES), lambda i: (0, 0)),
            pl.BlockSpec((1, LANES), lambda i: (0, 0)),
        ],
        out_specs=pl.BlockSpec((1, m, cout), lambda i: (i, 0, 0)),
        compiler_params=_COMPILER_PARAMS,
    )(patches, wmat, bias)


def fc_fused(x, w1, b1, w2, b2, w3, b3, *, block_m=256):
    """relu(x@W1+b1) -> relu(@W2+b2) -> @W3+b3, one kernel, weights VMEM-resident."""
    n, k_in = x.shape
    if n >= 2 * block_m:
        tm = block_m                          # large batch: big M tiles
    elif n >= 16:
        tm = ((-(-n // 2)) + 7) // 8 * 8      # 2 blocks -> both v7x cores busy
    else:
        tm = n                                # tiny batch: single full block
    n_pad = -(-n // tm) * tm
    if n_pad != n:
        x = jnp.pad(x, ((0, n_pad - n), (0, 0)))
    out = pl.pallas_call(
        _fc_fused_kernel,
        out_shape=jax.ShapeDtypeStruct((n_pad, LANES), jnp.float32),
        grid=(n_pad // tm,),
        in_specs=[
            pl.BlockSpec((tm, k_in), lambda i: (i, 0)),
            pl.BlockSpec((k_in, LANES), lambda i: (0, 0)),
            pl.BlockSpec((1, LANES), lambda i: (0, 0)),
            pl.BlockSpec((LANES, LANES), lambda i: (0, 0)),
            pl.BlockSpec((1, LANES), lambda i: (0, 0)),
            pl.BlockSpec((LANES, LANES), lambda i: (0, 0)),
            pl.BlockSpec((1, LANES), lambda i: (0, 0)),
        ],
        out_specs=pl.BlockSpec((tm, LANES), lambda i: (i, 0)),
        compiler_params=_COMPILER_PARAMS,
    )(x, w1, b1, w2, b2, w3, b3)
    return out[:n, :10]


# ----------------------------------------------------------------------------
# im2col with pool-grouped rows and TB samples merged into the M dim (glue)
# ----------------------------------------------------------------------------
def _im2col_pooled_blocked(x_nhwc, k, tb):
    """x (Npad,H,W,C), Npad%tb==0 -> (Nb, 4, tb*P, K); P=(OH/2)*(OW/2), K=k*k*C.

    Column order is (kh, kw, c); row order within a block is (sample, oh, ow).
    """
    npad, h, w, c = x_nhwc.shape
    nb = npad // tb
    oh, ow = h - k + 1, w - k + 1
    ohp, owp = oh // 2, ow // 2
    cols = []
    for kh in range(k):
        for kw in range(k):
            cols.append(x_nhwc[:, kh:kh + oh, kw:kw + ow, :])   # (Npad, OH, OW, C)
    p = jnp.stack(cols, axis=3)                                 # (Npad, OH, OW, kk, C)
    p = p.reshape(nb, tb, ohp, 2, owp, 2, k * k, c)
    p = p.transpose(0, 3, 5, 1, 2, 4, 6, 7)                     # (Nb,2,2,TB,OHp,OWp,kk,C)
    return p.reshape(nb, 4, tb * ohp * owp, k * k * c), ohp, owp


def _pick_tb(n):
    """Batch tile: amortize grid-step overhead, keep 'parallel' grid >= 2 steps."""
    if n >= 2 * TB_MAX:
        return TB_MAX
    return max(1, -(-n // 2))


# ----------------------------------------------------------------------------
# Parameters (PyTorch-style uniform(-1/sqrt(fan_in), +)) and one-time packing
# ----------------------------------------------------------------------------
def init_params(key):
    ks = jax.random.split(key, 10)

    def u(k, shape, fan_in):
        bound = 1.0 / float(fan_in) ** 0.5
        return jax.random.uniform(k, shape, jnp.float32, -bound, bound)

    return {
        "conv1_w": u(ks[0], (6, 3, 5, 5), 3 * 25),
        "conv1_b": u(ks[1], (6,), 3 * 25),
        "conv2_w": u(ks[2], (16, 6, 5, 5), 6 * 25),
        "conv2_b": u(ks[3], (16,), 6 * 25),
        "fc1_w": u(ks[4], (120, 400), 400),
        "fc1_b": u(ks[5], (120,), 400),
        "fc2_w": u(ks[6], (84, 120), 120),
        "fc2_b": u(ks[7], (84,), 120),
        "fc3_w": u(ks[8], (10, 84), 84),
        "fc3_b": u(ks[9], (10,), 84),
    }


def pack_params(p):
    """One-time weight re-layout: lane-dense (128-col) slabs, pre-transposed."""
    def pad_cols(m):
        r, c = m.shape
        return jnp.zeros((r, LANES), jnp.float32).at[:, :c].set(m)

    def pad_rows_cols(m):
        r, c = m.shape
        return jnp.zeros((LANES, LANES), jnp.float32).at[:r, :c].set(m)

    def pad_vec(v):
        return jnp.zeros((1, LANES), jnp.float32).at[0, :v.shape[0]].set(v)

    def conv_wmat(w):
        cout, cin, k, _ = w.shape
        # column order (kh, kw, c) to match _im2col_pooled_blocked
        return pad_cols(w.transpose(2, 3, 1, 0).reshape(k * k * cin, cout))

    # fc1: PyTorch flatten order is (c, h, w); our activation order is (h, w, c)
    # -> permute rows of fc1_w.T once here instead of permuting activations.
    w1t = p["fc1_w"].T.reshape(16, 25, 120).transpose(1, 0, 2).reshape(400, 120)

    return {
        "c1_w": conv_wmat(p["conv1_w"]), "c1_b": pad_vec(p["conv1_b"]),
        "c2_w": conv_wmat(p["conv2_w"]), "c2_b": pad_vec(p["conv2_b"]),
        "f1_w": pad_cols(w1t),           "f1_b": pad_vec(p["fc1_b"]),
        "f2_w": pad_rows_cols(p["fc2_w"].T), "f2_b": pad_vec(p["fc2_b"]),
        "f3_w": pad_rows_cols(p["fc3_w"].T), "f3_b": pad_vec(p["fc3_b"]),
    }


# ----------------------------------------------------------------------------
# Forward pass (matches Net.forward semantics)
# ----------------------------------------------------------------------------
def net_forward(packed, x):
    n = x.shape[0]
    tb = _pick_tb(n)
    n_pad = -(-n // tb) * tb
    x = jnp.transpose(x, (0, 2, 3, 1))                          # NCHW -> NHWC once
    if n_pad != n:
        x = jnp.pad(x, ((0, n_pad - n), (0, 0), (0, 0), (0, 0)))

    p1, oh1, ow1 = _im2col_pooled_blocked(x, 5, tb)             # (Nb, 4, tb*196, 75)
    h1 = conv_relu_pool(p1, packed["c1_w"], packed["c1_b"], 8)  # (Nb, tb*196, 8)
    h1 = h1.reshape(n_pad, oh1 * ow1, 8)[:, :, :6]
    h1 = h1.reshape(n_pad, oh1, ow1, 6)                         # (Npad, 14, 14, 6)

    p2, oh2, ow2 = _im2col_pooled_blocked(h1, 5, tb)            # (Nb, 4, tb*25, 150)
    h2 = conv_relu_pool(p2, packed["c2_w"], packed["c2_b"], 16) # (Nb, tb*25, 16)
    feat = h2.reshape(n_pad, oh2 * ow2, 16)[:n].reshape(n, 400) # (N, 400), (h,w,c)

    return fc_fused(feat,
                    packed["f1_w"], packed["f1_b"],
                    packed["f2_w"], packed["f2_b"],
                    packed["f3_w"], packed["f3_b"])             # (N, 10)


# ----------------------------------------------------------------------------
# Pure-JAX reference (for correctness check only)
# ----------------------------------------------------------------------------
def _reference_forward(params, x):
    dn = ("NCHW", "OIHW", "NCHW")
    hp = lax.Precision.HIGHEST
    y = lax.conv_general_dilated(x, params["conv1_w"], (1, 1), "VALID",
                                 dimension_numbers=dn, precision=hp)
    y = jax.nn.relu(y + params["conv1_b"][None, :, None, None])
    y = lax.reduce_window(y, -jnp.inf, lax.max, (1, 1, 2, 2), (1, 1, 2, 2),
                          "VALID")
    y = lax.conv_general_dilated(y, params["conv2_w"], (1, 1), "VALID",
                                 dimension_numbers=dn, precision=hp)
    y = jax.nn.relu(y + params["conv2_b"][None, :, None, None])
    y = lax.reduce_window(y, -jnp.inf, lax.max, (1, 1, 2, 2), (1, 1, 2, 2),
                          "VALID")
    y = y.reshape(y.shape[0], 400)
    y = jax.nn.relu(jnp.dot(y, params["fc1_w"].T, precision=hp) + params["fc1_b"])
    y = jax.nn.relu(jnp.dot(y, params["fc2_w"].T, precision=hp) + params["fc2_b"])
    return jnp.dot(y, params["fc3_w"].T, precision=hp) + params["fc3_b"]


if __name__ == "__main__":
    key = jax.random.PRNGKey(0)
    pkey, xkey, xkey2 = jax.random.split(key, 3)
    params = init_params(pkey)
    packed = pack_params(params)                 # one-time re-layout, outside jit

    fwd = jax.jit(net_forward)
    ref_fwd = jax.jit(_reference_forward)

    # fc1 dimension (16*5*5) implies 32x32 spatial input (CIFAR).
    # tiny batch: exercises TB=1 (2 conv grid steps) and the single-block FC path
    x_small = jax.random.normal(xkey, (2, 3, 32, 32), jnp.float32)
    out = jax.block_until_ready(fwd(packed, x_small))
    assert out.shape == (2, 10) and out.dtype == jnp.float32
    ref = jax.block_until_ready(ref_fwd(params, x_small))
    assert bool(jnp.allclose(out, ref, rtol=2e-3, atol=2e-3)), "mismatch (batch=2)"

    # batched path: TB=8 (2 conv grid steps, M=1568 conv1 matmuls) + 2 FC blocks
    x_big = jax.random.normal(xkey2, (16, 3, 32, 32), jnp.float32)
    out_b = jax.block_until_ready(fwd(packed, x_big))
    assert out_b.shape == (16, 10)
    ref_b = jax.block_until_ready(ref_fwd(params, x_big))
    assert bool(jnp.allclose(out_b, ref_b, rtol=2e-3, atol=2e-3)), "mismatch (batch=16)"

    print("KERNEL_OK")
</pallas_src>

<mosaic_0001>
module attributes {stable_mosaic.version = 11 : i64} {
  func.func @_conv_relu_pool_kernel(%arg0: i32, %arg1: memref<1x4x196x75xf32, #tpu.memory_space<vmem>>, %arg2: memref<75x128xf32, #tpu.memory_space<vmem>>, %arg3: memref<1x128xf32, #tpu.memory_space<vmem>>, %arg4: memref<1x196x8xf32, #tpu.memory_space<vmem>>) attributes {dimension_semantics = [#tpu.dimension_semantics<parallel>], iteration_bounds = array<i64: 2>, scalar_prefetch = 0 : i64, scratch_operands = 0 : i64, tpu.core_type = #tpu.core_type<tc>, window_params = [{transform_indices = @transform_0, window_bounds = array<i64: 1, 4, 196, 75>}, {pipeline_mode = #tpu.pipeline_mode<synchronous>, transform_indices = @transform_1, window_bounds = array<i64: 75, 128>}, {pipeline_mode = #tpu.pipeline_mode<synchronous>, transform_indices = @transform_2, window_bounds = array<i64: 1, 128>}, {transform_indices = @transform_3, window_bounds = array<i64: 1, 196, 8>}]} {
    %c0 = arith.constant 0 : index
    %c0_0 = arith.constant 0 : index
    %0 = vector.load %arg2[%c0, %c0_0] : memref<75x128xf32, #tpu.memory_space<vmem>>, vector<75x128xf32>
    %c0_1 = arith.constant 0 : index
    %c0_2 = arith.constant 0 : index
    %c0_3 = arith.constant 0 : index
    %c0_4 = arith.constant 0 : index
    %1 = vector.load %arg1[%c0_1, %c0_2, %c0_3, %c0_4] : memref<1x4x196x75xf32, #tpu.memory_space<vmem>>, vector<1x1x196x75xf32>
    %2 = vector.shape_cast %1 : vector<1x1x196x75xf32> to vector<196x75xf32>
    %cst = arith.constant dense<0.000000e+00> : vector<196x128xf32>
    %3 = tpu.matmul %2, %0, %cst {dimension_numbers = #tpu.dot_dimension_numbers<[1], [0], [0], [1], [0, 0, 1, 1], [], []>} : vector<196x75xf32>, vector<75x128xf32>, vector<196x128xf32> -> vector<196x128xf32>
    %c0_5 = arith.constant 0 : index
    %c1 = arith.constant 1 : index
    %c0_6 = arith.constant 0 : index
    %c0_7 = arith.constant 0 : index
    %4 = vector.load %arg1[%c0_5, %c1, %c0_6, %c0_7] : memref<1x4x196x75xf32, #tpu.memory_space<vmem>>, vector<1x1x196x75xf32>
    %5 = vector.shape_cast %4 : vector<1x1x196x75xf32> to vector<196x75xf32>
    %cst_8 = arith.constant dense<0.000000e+00> : vector<196x128xf32>
    %6 = tpu.matmul %5, %0, %cst_8 {dimension_numbers = #tpu.dot_dimension_numbers<[1], [0], [0], [1], [0, 0, 1, 1], [], []>} : vector<196x75xf32>, vector<75x128xf32>, vector<196x128xf32> -> vector<196x128xf32>
    %7 = arith.maximumf %3, %6 : vector<196x128xf32>
    %c0_9 = arith.constant 0 : index
    %c2 = arith.constant 2 : index
    %c0_10 = arith.constant 0 : index
    %c0_11 = arith.constant 0 : index
    %8 = vector.load %arg1[%c0_9, %c2, %c0_10, %c0_11] : memref<1x4x196x75xf32, #tpu.memory_space<vmem>>, vector<1x1x196x75xf32>
    %9 = vector.shape_cast %8 : vector<1x1x196x75xf32> to vector<196x75xf32>
    %cst_12 = arith.constant dense<0.000000e+00> : vector<196x128xf32>
    %10 = tpu.matmul %9, %0, %cst_12 {dimension_numbers = #tpu.dot_dimension_numbers<[1], [0], [0], [1], [0, 0, 1, 1], [], []>} : vector<196x75xf32>, vector<75x128xf32>, vector<196x128xf32> -> vector<196x128xf32>
    %11 = arith.maximumf %7, %10 : vector<196x128xf32>
    %c0_13 = arith.constant 0 : index
    %c3 = arith.constant 3 : index
    %c0_14 = arith.constant 0 : index
    %c0_15 = arith.constant 0 : index
    %12 = vector.load %arg1[%c0_13, %c3, %c0_14, %c0_15] : memref<1x4x196x75xf32, #tpu.memory_space<vmem>>, vector<1x1x196x75xf32>
    %13 = vector.shape_cast %12 : vector<1x1x196x75xf32> to vector<196x75xf32>
    %cst_16 = arith.constant dense<0.000000e+00> : vector<196x128xf32>
    %14 = tpu.matmul %13, %0, %cst_16 {dimension_numbers = #tpu.dot_dimension_numbers<[1], [0], [0], [1], [0, 0, 1, 1], [], []>} : vector<196x75xf32>, vector<75x128xf32>, vector<196x128xf32> -> vector<196x128xf32>
    %15 = arith.maximumf %11, %14 : vector<196x128xf32>
    %c0_17 = arith.constant 0 : index
    %c0_18 = arith.constant 0 : index
    %16 = vector.load %arg3[%c0_17, %c0_18] : memref<1x128xf32, #tpu.memory_space<vmem>>, vector<1x128xf32>
    %17 = vector.broadcast %16 : vector<1x128xf32> to vector<196x128xf32>
    %18 = arith.addf %15, %17 : vector<196x128xf32>
    %cst_19 = arith.constant 0.000000e+00 : f32
    %19 = vector.broadcast %cst_19 : f32 to vector<196x128xf32>
    %20 = arith.maximumf %18, %19 : vector<196x128xf32>
    %21 = vector.extract_strided_slice %20 {offsets = [0, 0], sizes = [196, 8], strides = [1, 1]} : vector<196x128xf32> to vector<196x8xf32>
    %c0_20 = arith.constant 0 : index
    %c0_21 = arith.constant 0 : index
    %c0_22 = arith.constant 0 : index
    %22 = vector.load %arg4[%c0_20, %c0_21, %c0_22] : memref<1x196x8xf32, #tpu.memory_space<vmem>>, vector<1x196x8xf32>
    %23 = vector.shape_cast %22 : vector<1x196x8xf32> to vector<196x8xf32>
    %24 = vector.shape_cast %21 : vector<196x8xf32> to vector<1x196x8xf32>
    tpu.vector_store %arg4[%c0_20, %c0_21, %c0_22], %24 {strides = array<i32>} : memref<1x196x8xf32, #tpu.memory_space<vmem>>, vector<1x196x8xf32>,
    return
  }
  func.func @transform_0(%arg0: i32) -> (i32, i32, i32, i32) {
    %c0_i32 = arith.constant 0 : i32
    %c0_i32_0 = arith.constant 0 : i32
    %c0_i32_1 = arith.constant 0 : i32
    %c0_i32_2 = arith.constant 0 : i32
    return %arg0, %c0_i32, %c0_i32_0, %c0_i32_1 : i32, i32, i32, i32
  }
  func.func @transform_1(%arg0: i32) -> (i32, i32) {
    %c0_i32 = arith.constant 0 : i32
    %c0_i32_0 = arith.constant 0 : i32
    %c0_i32_1 = arith.constant 0 : i32
    return %c0_i32, %c0_i32_0 : i32, i32
  }
  func.func @transform_2(%arg0: i32) -> (i32, i32) {
    %c0_i32 = arith.constant 0 : i32
    %c0_i32_0 = arith.constant 0 : i32
    %c0_i32_1 = arith.constant 0 : i32
    return %c0_i32, %c0_i32_0 : i32, i32
  }
  func.func @transform_3(%arg0: i32) -> (i32, i32, i32) {
    %c0_i32 = arith.constant 0 : i32
    %c0_i32_0 = arith.constant 0 : i32
    %c0_i32_1 = arith.constant 0 : i32
    return %arg0, %c0_i32, %c0_i32_0 : i32, i32, i32
  }
}

module attributes {stable_mosaic.version = 11 : i64} {
  func.func @_conv_relu_pool_kernel(%arg0: i32, %arg1: memref<1x4x25x150xf32, #tpu.memory_space<vmem>>, %arg2: memref<150x128xf32, #tpu.memory_space<vmem>>, %arg3: memref<1x128xf32, #tpu.memory_space<vmem>>, %arg4: memref<1x25x16xf32, #tpu.memory_space<vmem>>) attributes {dimension_semantics = [#tpu.dimension_semantics<parallel>], iteration_bounds = array<i64: 2>, scalar_prefetch = 0 : i64, scratch_operands = 0 : i64, tpu.core_type = #tpu.core_type<tc>, window_params = [{transform_indices = @transform_0, window_bounds = array<i64: 1, 4, 25, 150>}, {pipeline_mode = #tpu.pipeline_mode<synchronous>, transform_indices = @transform_1, window_bounds = array<i64: 150, 128>}, {pipeline_mode = #tpu.pipeline_mode<synchronous>, transform_indices = @transform_2, window_bounds = array<i64: 1, 128>}, {transform_indices = @transform_3, window_bounds = array<i64: 1, 25, 16>}]} {
    %c0 = arith.constant 0 : index
    %c0_0 = arith.constant 0 : index
    %0 = vector.load %arg2[%c0, %c0_0] : memref<150x128xf32, #tpu.memory_space<vmem>>, vector<150x128xf32>
    %c0_1 = arith.constant 0 : index
    %c0_2 = arith.constant 0 : index
    %c0_3 = arith.constant 0 : index
    %c0_4 = arith.constant 0 : index
    %1 = vector.load %arg1[%c0_1, %c0_2, %c0_3, %c0_4] : memref<1x4x25x150xf32, #tpu.memory_space<vmem>>, vector<1x1x25x150xf32>
    %2 = vector.shape_cast %1 : vector<1x1x25x150xf32> to vector<25x150xf32>
    %cst = arith.constant dense<0.000000e+00> : vector<25x128xf32>
    %3 = tpu.matmul %2, %0, %cst {dimension_numbers = #tpu.dot_dimension_numbers<[1], [0], [0], [1], [0, 0, 1, 1], [], []>} : vector<25x150xf32>, vector<150x128xf32>, vector<25x128xf32> -> vector<25x128xf32>
    %c0_5 = arith.constant 0 : index
    %c1 = arith.constant 1 : index
    %c0_6 = arith.constant 0 : index
    %c0_7 = arith.constant 0 : index
    %4 = vector.load %arg1[%c0_5, %c1, %c0_6, %c0_7] : memref<1x4x25x150xf32, #tpu.memory_space<vmem>>, vector<1x1x25x150xf32>
    %5 = vector.shape_cast %4 : vector<1x1x25x150xf32> to vector<25x150xf32>
    %cst_8 = arith.constant dense<0.000000e+00> : vector<25x128xf32>
    %6 = tpu.matmul %5, %0, %cst_8 {dimension_numbers = #tpu.dot_dimension_numbers<[1], [0], [0], [1], [0, 0, 1, 1], [], []>} : vector<25x150xf32>, vector<150x128xf32>, vector<25x128xf32> -> vector<25x128xf32>
    %7 = arith.maximumf %3, %6 : vector<25x128xf32>
    %c0_9 = arith.constant 0 : index
    %c2 = arith.constant 2 : index
    %c0_10 = arith.constant 0 : index
    %c0_11 = arith.constant 0 : index
    %8 = vector.load %arg1[%c0_9, %c2, %c0_10, %c0_11] : memref<1x4x25x150xf32, #tpu.memory_space<vmem>>, vector<1x1x25x150xf32>
    %9 = vector.shape_cast %8 : vector<1x1x25x150xf32> to vector<25x150xf32>
    %cst_12 = arith.constant dense<0.000000e+00> : vector<25x128xf32>
    %10 = tpu.matmul %9, %0, %cst_12 {dimension_numbers = #tpu.dot_dimension_numbers<[1], [0], [0], [1], [0, 0, 1, 1], [], []>} : vector<25x150xf32>, vector<150x128xf32>, vector<25x128xf32> -> vector<25x128xf32>
    %11 = arith.maximumf %7, %10 : vector<25x128xf32>
    %c0_13 = arith.constant 0 : index
    %c3 = arith.constant 3 : index
    %c0_14 = arith.constant 0 : index
    %c0_15 = arith.constant 0 : index
    %12 = vector.load %arg1[%c0_13, %c3, %c0_14, %c0_15] : memref<1x4x25x150xf32, #tpu.memory_space<vmem>>, vector<1x1x25x150xf32>
    %13 = vector.shape_cast %12 : vector<1x1x25x150xf32> to vector<25x150xf32>
    %cst_16 = arith.constant dense<0.000000e+00> : vector<25x128xf32>
    %14 = tpu.matmul %13, %0, %cst_16 {dimension_numbers = #tpu.dot_dimension_numbers<[1], [0], [0], [1], [0, 0, 1, 1], [], []>} : vector<25x150xf32>, vector<150x128xf32>, vector<25x128xf32> -> vector<25x128xf32>
    %15 = arith.maximumf %11, %14 : vector<25x128xf32>
    %c0_17 = arith.constant 0 : index
    %c0_18 = arith.constant 0 : index
    %16 = vector.load %arg3[%c0_17, %c0_18] : memref<1x128xf32, #tpu.memory_space<vmem>>, vector<1x128xf32>
    %17 = vector.broadcast %16 : vector<1x128xf32> to vector<25x128xf32>
    %18 = arith.addf %15, %17 : vector<25x128xf32>
    %cst_19 = arith.constant 0.000000e+00 : f32
    %19 = vector.broadcast %cst_19 : f32 to vector<25x128xf32>
    %20 = arith.maximumf %18, %19 : vector<25x128xf32>
    %21 = vector.extract_strided_slice %20 {offsets = [0, 0], sizes = [25, 16], strides = [1, 1]} : vector<25x128xf32> to vector<25x16xf32>
    %c0_20 = arith.constant 0 : index
    %c0_21 = arith.constant 0 : index
    %c0_22 = arith.constant 0 : index
    %22 = vector.load %arg4[%c0_20, %c0_21, %c0_22] : memref<1x25x16xf32, #tpu.memory_space<vmem>>, vector<1x25x16xf32>
    %23 = vector.shape_cast %22 : vector<1x25x16xf32> to vector<25x16xf32>
    %24 = vector.shape_cast %21 : vector<25x16xf32> to vector<1x25x16xf32>
    tpu.vector_store %arg4[%c0_20, %c0_21, %c0_22], %24 {strides = array<i32>} : memref<1x25x16xf32, #tpu.memory_space<vmem>>, vector<1x25x16xf32>,
    return
  }
  func.func @transform_0(%arg0: i32) -> (i32, i32, i32, i32) {
    %c0_i32 = arith.constant 0 : i32
    %c0_i32_0 = arith.constant 0 : i32
    %c0_i32_1 = arith.constant 0 : i32
    %c0_i32_2 = arith.constant 0 : i32
    return %arg0, %c0_i32, %c0_i32_0, %c0_i32_1 : i32, i32, i32, i32
  }
  func.func @transform_1(%arg0: i32) -> (i32, i32) {
    %c0_i32 = arith.constant 0 : i32
    %c0_i32_0 = arith.constant 0 : i32
    %c0_i32_1 = arith.constant 0 : i32
    return %c0_i32, %c0_i32_0 : i32, i32
  }
  func.func @transform_2(%arg0: i32) -> (i32, i32) {
    %c0_i32 = arith.constant 0 : i32
    %c0_i32_0 = arith.constant 0 : i32
    %c0_i32_1 = arith.constant 0 : i32
    return %c0_i32, %c0_i32_0 : i32, i32
  }
  func.func @transform_3(%arg0: i32) -> (i32, i32, i32) {
    %c0_i32 = arith.constant 0 : i32
    %c0_i32_0 = arith.constant 0 : i32
    %c0_i32_1 = arith.constant 0 : i32
    return %arg0, %c0_i32, %c0_i32_0 : i32, i32, i32
  }
}

module attributes {stable_mosaic.version = 11 : i64} {
  func.func @_fc_fused_kernel(%arg0: i32, %arg1: memref<2x400xf32, #tpu.memory_space<vmem>>, %arg2: memref<400x128xf32, #tpu.memory_space<vmem>>, %arg3: memref<1x128xf32, #tpu.memory_space<vmem>>, %arg4: memref<128x128xf32, #tpu.memory_space<vmem>>, %arg5: memref<1x128xf32, #tpu.memory_space<vmem>>, %arg6: memref<128x128xf32, #tpu.memory_space<vmem>>, %arg7: memref<1x128xf32, #tpu.memory_space<vmem>>, %arg8: memref<2x128xf32, #tpu.memory_space<vmem>>) attributes {dimension_semantics = [#tpu.dimension_semantics<parallel>], iteration_bounds = array<i64: 1>, scalar_prefetch = 0 : i64, scratch_operands = 0 : i64, tpu.core_type = #tpu.core_type<tc>, window_params = [{transform_indices = @transform_0, window_bounds = array<i64: 2, 400>}, {pipeline_mode = #tpu.pipeline_mode<synchronous>, transform_indices = @transform_1, window_bounds = array<i64: 400, 128>}, {pipeline_mode = #tpu.pipeline_mode<synchronous>, transform_indices = @transform_2, window_bounds = array<i64: 1, 128>}, {pipeline_mode = #tpu.pipeline_mode<synchronous>, transform_indices = @transform_3, window_bounds = array<i64: 128, 128>}, {pipeline_mode = #tpu.pipeline_mode<synchronous>, transform_indices = @transform_4, window_bounds = array<i64: 1, 128>}, {pipeline_mode = #tpu.pipeline_mode<synchronous>, transform_indices = @transform_5, window_bounds = array<i64: 128, 128>}, {pipeline_mode = #tpu.pipeline_mode<synchronous>, transform_indices = @transform_6, window_bounds = array<i64: 1, 128>}, {transform_indices = @transform_7, window_bounds = array<i64: 2, 128>}]} {
    %c0 = arith.constant 0 : index
    %c0_0 = arith.constant 0 : index
    %0 = vector.load %arg1[%c0, %c0_0] : memref<2x400xf32, #tpu.memory_space<vmem>>, vector<2x400xf32>
    %c0_1 = arith.constant 0 : index
    %c0_2 = arith.constant 0 : index
    %1 = vector.load %arg2[%c0_1, %c0_2] : memref<400x128xf32, #tpu.memory_space<vmem>>, vector<400x128xf32>
    %cst = arith.constant dense<0.000000e+00> : vector<2x128xf32>
    %2 = tpu.matmul %0, %1, %cst {dimension_numbers = #tpu.dot_dimension_numbers<[1], [0], [0], [1], [0, 0, 1, 1], [], []>} : vector<2x400xf32>, vector<400x128xf32>, vector<2x128xf32> -> vector<2x128xf32>
    %c0_3 = arith.constant 0 : index
    %c0_4 = arith.constant 0 : index
    %3 = vector.load %arg3[%c0_3, %c0_4] : memref<1x128xf32, #tpu.memory_space<vmem>>, vector<1x128xf32>
    %4 = vector.broadcast %3 : vector<1x128xf32> to vector<2x128xf32>
    %5 = arith.addf %2, %4 : vector<2x128xf32>
    %cst_5 = arith.constant 0.000000e+00 : f32
    %6 = vector.broadcast %cst_5 : f32 to vector<2x128xf32>
    %7 = arith.maximumf %5, %6 : vector<2x128xf32>
    %c0_6 = arith.constant 0 : index
    %c0_7 = arith.constant 0 : index
    %8 = vector.load %arg4[%c0_6, %c0_7] : memref<128x128xf32, #tpu.memory_space<vmem>>, vector<128x128xf32>
    %cst_8 = arith.constant dense<0.000000e+00> : vector<2x128xf32>
    %9 = tpu.matmul %7, %8, %cst_8 {dimension_numbers = #tpu.dot_dimension_numbers<[1], [0], [0], [1], [0, 0, 1, 1], [], []>} : vector<2x128xf32>, vector<128x128xf32>, vector<2x128xf32> -> vector<2x128xf32>
    %c0_9 = arith.constant 0 : index
    %c0_10 = arith.constant 0 : index
    %10 = vector.load %arg5[%c0_9, %c0_10] : memref<1x128xf32, #tpu.memory_space<vmem>>, vector<1x128xf32>
    %11 = vector.broadcast %10 : vector<1x128xf32> to vector<2x128xf32>
    %12 = arith.addf %9, %11 : vector<2x128xf32>
    %cst_11 = arith.constant 0.000000e+00 : f32
    %13 = vector.broadcast %cst_11 : f32 to vector<2x128xf32>
    %14 = arith.maximumf %12, %13 : vector<2x128xf32>
    %c0_12 = arith.constant 0 : index
    %c0_13 = arith.constant 0 : index
    %15 = vector.load %arg6[%c0_12, %c0_13] : memref<128x128xf32, #tpu.memory_space<vmem>>, vector<128x128xf32>
    %cst_14 = arith.constant dense<0.000000e+00> : vector<2x128xf32>
    %16 = tpu.matmul %14, %15, %cst_14 {dimension_numbers = #tpu.dot_dimension_numbers<[1], [0], [0], [1], [0, 0, 1, 1], [], []>} : vector<2x128xf32>, vector<128x128xf32>, vector<2x128xf32> -> vector<2x128xf32>
    %c0_15 = arith.constant 0 : index
    %c0_16 = arith.constant 0 : index
    %17 = vector.load %arg7[%c0_15, %c0_16] : memref<1x128xf32, #tpu.memory_space<vmem>>, vector<1x128xf32>
    %18 = vector.broadcast %17 : vector<1x128xf32> to vector<2x128xf32>
    %19 = arith.addf %16, %18 : vector<2x128xf32>
    %c0_17 = arith.constant 0 : index
    %c0_18 = arith.constant 0 : index
    %20 = vector.load %arg8[%c0_17, %c0_18] : memref<2x128xf32, #tpu.memory_space<vmem>>, vector<2x128xf32>
    tpu.vector_store %arg8[%c0_17, %c0_18], %19 {strides = array<i32>} : memref<2x128xf32, #tpu.memory_space<vmem>>, vector<2x128xf32>,
    return
  }
  func.func @transform_0(%arg0: i32) -> (i32, i32) {
    %c0_i32 = arith.constant 0 : i32
    %c0_i32_0 = arith.constant 0 : i32
    return %arg0, %c0_i32 : i32, i32
  }
  func.func @transform_1(%arg0: i32) -> (i32, i32) {
    %c0_i32 = arith.constant 0 : i32
    %c0_i32_0 = arith.constant 0 : i32
    %c0_i32_1 = arith.constant 0 : i32
    return %c0_i32, %c0_i32_0 : i32, i32
  }
  func.func @transform_2(%arg0: i32) -> (i32, i32) {
    %c0_i32 = arith.constant 0 : i32
    %c0_i32_0 = arith.constant 0 : i32
    %c0_i32_1 = arith.constant 0 : i32
    return %c0_i32, %c0_i32_0 : i32, i32
  }
  func.func @transform_3(%arg0: i32) -> (i32, i32) {
    %c0_i32 = arith.constant 0 : i32
    %c0_i32_0 = arith.constant 0 : i32
    %c0_i32_1 = arith.constant 0 : i32
    return %c0_i32, %c0_i32_0 : i32, i32
  }
  func.func @transform_4(%arg0: i32) -> (i32, i32) {
    %c0_i32 = arith.constant 0 : i32
    %c0_i32_0 = arith.constant 0 : i32
    %c0_i32_1 = arith.constant 0 : i32
    return %c0_i32, %c0_i32_0 : i32, i32
  }
  func.func @transform_5(%arg0: i32) -> (i32, i32) {
    %c0_i32 = arith.constant 0 : i32
    %c0_i32_0 = arith.constant 0 : i32
    %c0_i32_1 = arith.constant 0 : i32
    return %c0_i32, %c0_i32_0 : i32, i32
  }
  func.func @transform_6(%arg0: i32) -> (i32, i32) {
    %c0_i32 = arith.constant 0 : i32
    %c0_i32_0 = arith.constant 0 : i32
    %c0_i32_1 = arith.constant 0 : i32
    return %c0_i32, %c0_i32_0 : i32, i32
  }
  func.func @transform_7(%arg0: i32) -> (i32, i32) {
    %c0_i32 = arith.constant 0 : i32
    %c0_i32_0 = arith.constant 0 : i32
    return %arg0, %c0_i32 : i32, i32
  }
}

</mosaic_0001>

<llo_original>
// kernel: net_forward.3
$region0: #{net_forward.3}
  #allocation0 [shape = 'u32[]', space=smem, size = 0x4, offset = 0x4, fixed_abs, tag = 'smem constant byte address 0x4 - core index']
  #allocation1 [shape = 'u32[144,128]{1,0:T(1,128)}', space=vmem, size = 0x12000, scoped, tag = 'internal scratch']
  %s0 = inlined_call_operand.vmem [shape: f32[2,4,196,75], index: 0, kind: input, shape index: {}]
  %s1 = inlined_call_operand.vmem [shape: f32[75,128], index: 1, kind: input, shape index: {}]
  %s2 = inlined_call_operand.vmem [shape: f32[1,128], index: 2, kind: input, shape index: {}]
  %s3 = inlined_call_operand.vmem [shape: f32[2,196,8], index: 3, kind: output, shape index: {}]
  %s4 = sld [smem:[#allocation0]]
  $region45: #{net_forward.3} parent=0
    _
  %s6 = ssub.s32 1, %s4
  %s7 = scalar_select 0, %s6, %s4
  loop: start=0, step=1, limit=4
  $region2: #{net_forward.3} parent=0 // loop_pre_header
    _
  $region3: #{net_forward.3} parent=0 // loop_header
    %s9 = sphi 0, %s13
    %p10 = scmp.ge.s32.totalorder %s9, 4
    %s19 = sphi 0, %s21
    %s22 = sphi 0, %s19
    %s23 = sphi 0, %s22
    %s39 = sphi 0, %s23
    %s43 = sphi 0, %s43
    %s45 = sphi 0, %s43
    %s46 = sphi 0, %s45
    %s60 = sphi 0, %s46
    %s64 = sphi 0, %s64
    %s66 = sphi 0, %s64
    %s67 = sphi 0, %s66
    %s81 = sphi 0, %s67
    %s87 = sphi 0, %s89
    %s90 = sphi 0, %s87
    %s91 = sphi 0, %s90
    %s107 = sphi 0, %s91
  $region4: #{net_forward.3} parent=0 // loop_header_branch
    %12 = sbr.rel (%p10) target = $region8
  $region5: #{net_forward.3} parent=0 // loop_body
    %s14 = ssub.s32 %s9, 1
    %s15 = ssub.s32 %s9, 2
    %s16 = sadd.s32 %s9, 1
    %s17 = ssub.s32 %s9, %s16
    %p18 = scmp.eq.s32.totalorder %s17, 0
    %s20 = sadd.s32 %s19, 1
    %s21 = scalar_select %p18, %s19, %s20
    %p24 = pneg %p18
    %p25 = scmp.eq.s32.totalorder %s9, 1
    %p26 = por %p24, %p25
    %p27 = scmp.ne.s32.totalorder %s19, %s22
    %p28 = scmp.eq.s32.totalorder %s9, 0
    %p29 = por %p27, %p28
    %p30 = scmp.ne.s32.totalorder %s19, %s22
    %p31 = scmp.eq.s32.totalorder %s14, 1
    %p32 = por %p30, %p31
    %p33 = scmp.ne.s32.totalorder %s22, %s23
    %p34 = scmp.eq.s32.totalorder %s14, 0
    %p35 = por %p33, %p34
    %p36 = scmp.ne.s32.totalorder %s22, %s23
    %p37 = scmp.eq.s32.totalorder %s15, 1
    %p38 = por %p36, %p37
    %p40 = scmp.ne.s32.totalorder %s23, %s39
    %p41 = scmp.eq.s32.totalorder %s15, 0
    %p42 = por %p40, %p41
    %s44 = sadd.s32 %s43, 1
    %p47 = scmp.eq.s32.totalorder %s9, 1
    %p48 = scmp.ne.s32.totalorder %s43, %s45
    %p49 = scmp.eq.s32.totalorder %s9, 0
    %p50 = por %p48, %p49
    %p51 = scmp.ne.s32.totalorder %s43, %s45
    %p52 = scmp.eq.s32.totalorder %s14, 1
    %p53 = por %p51, %p52
    %p54 = scmp.ne.s32.totalorder %s45, %s46
    %p55 = scmp.eq.s32.totalorder %s14, 0
    %p56 = por %p54, %p55
    %p57 = scmp.ne.s32.totalorder %s45, %s46
    %p58 = scmp.eq.s32.totalorder %s15, 1
    %p59 = por %p57, %p58
    %p61 = scmp.ne.s32.totalorder %s46, %s60
    %p62 = scmp.eq.s32.totalorder %s15, 0
    %p63 = por %p61, %p62
    %s65 = sadd.s32 %s64, 1
    %p68 = scmp.eq.s32.totalorder %s9, 1
    %p69 = scmp.ne.s32.totalorder %s64, %s66
    %p70 = scmp.eq.s32.totalorder %s9, 0
    %p71 = por %p69, %p70
    %p72 = scmp.ne.s32.totalorder %s64, %s66
    %p73 = scmp.eq.s32.totalorder %s14, 1
    %p74 = por %p72, %p73
    %p75 = scmp.ne.s32.totalorder %s66, %s67
    %p76 = scmp.eq.s32.totalorder %s14, 0
    %p77 = por %p75, %p76
    %p78 = scmp.ne.s32.totalorder %s66, %s67
    %p79 = scmp.eq.s32.totalorder %s15, 1
    %p80 = por %p78, %p79
    %p82 = scmp.ne.s32.totalorder %s67, %s81
    %p83 = scmp.eq.s32.totalorder %s15, 0
    %p84 = por %p82, %p83
    %s85 = ssub.s32 %s9, %s16
    %p86 = scmp.eq.s32.totalorder %s85, 0
    %s88 = sadd.s32 %s87, 1
    %s89 = scalar_select %p86, %s87, %s88
    %p92 = pneg %p86
    %p93 = scmp.eq.s32.totalorder %s9, 1
    %p94 = por %p92, %p93
    %p95 = scmp.ne.s32.totalorder %s87, %s90
    %p96 = scmp.eq.s32.totalorder %s9, 0
    %p97 = por %p95, %p96
    %p98 = scmp.ne.s32.totalorder %s87, %s90
    %p99 = scmp.eq.s32.totalorder %s14, 1
    %p100 = por %p98, %p99
    %p101 = scmp.ne.s32.totalorder %s90, %s91
    %p102 = scmp.eq.s32.totalorder %s14, 0
    %p103 = por %p101, %p102
    %p104 = scmp.ne.s32.totalorder %s90, %s91
    %p105 = scmp.eq.s32.totalorder %s15, 1
    %p106 = por %p104, %p105
    %p108 = scmp.ne.s32.totalorder %s91, %s107
    %p109 = scmp.eq.s32.totalorder %s15, 0
    %p110 = por %p108, %p109
    %p111 = scmp.le.s32.totalorder 1, %s9
    %p112 = scmp.lt.s32.totalorder %s9, 3
    %p113 = pnand %p111, %p112
    %p114 = pneg %p113
    // Predicated region
    $region9: #{net_forward.3} parent=5 // pred_check
      _
    $region10: #{net_forward.3} parent=5 // pred_check_branch
      %116 = sbr.rel (%p113) target = $region12
    $region11: #{net_forward.3} parent=5 // pred_region
      %s117 = ssub.s32 %s9, 1
      // Predicated region
      $region13: #{net_forward.3} parent=11 // pred_check
        %p118 = pneg %p56
      $region14: #{net_forward.3} parent=11 // pred_check_branch
        %120 = sbr.rel (%p118) target = $region16
      $region15: #{net_forward.3} parent=11 // pred_region
        _
      $region16: #{net_forward.3} parent=11 // pred_fallthru
        _
      // Predicated region
      $region17: #{net_forward.3} parent=11 // pred_check
        %p121 = pneg %p77
      $region18: #{net_forward.3} parent=11 // pred_check_branch
        %123 = sbr.rel (%p121) target = $region20
      $region19: #{net_forward.3} parent=11 // pred_region
        _
      $region20: #{net_forward.3} parent=11 // pred_fallthru
        _
    $region12: #{net_forward.3} parent=5 // pred_fallthru
      _
    %p124 = scmp.lt.s32.totalorder %s9, 2
    // Predicated region
    $region21: #{net_forward.3} parent=5 // pred_check
      %p125 = pneg %p124
    $region22: #{net_forward.3} parent=5 // pred_check_branch
      %127 = sbr.rel (%p125) target = $region24
    $region23: #{net_forward.3} parent=5 // pred_region
      // Predicated region
      $region25: #{net_forward.3} parent=23 // pred_check
        %p128 = pneg %p29
      $region26: #{net_forward.3} parent=23 // pred_check_branch
        %130 = sbr.rel (%p128) target = $region28
      $region27: #{net_forward.3} parent=23 // pred_region
        %p131 = scmp.lt.s32.totalorder %s9, 1
        %s132 = scalar_select %p131, %s9, 1
        %s133 = smul.addr %s132, 100
        %s134 = smul.addr %s133, 8
        %s135 = scalar_lea.vmem %s0, %s134
      $region28: #{net_forward.3} parent=23 // pred_fallthru
        _
    $region24: #{net_forward.3} parent=5 // pred_fallthru
      _
    %p136 = scmp.le.s32.totalorder 1, %s9
    %p137 = scmp.lt.s32.totalorder %s9, 3
    %p138 = pnand %p136, %p137
    %p139 = pneg %p138
    // Predicated region
    $region29: #{net_forward.3} parent=5 // pred_check
      _
    $region30: #{net_forward.3} parent=5 // pred_check_branch
      %141 = sbr.rel (%p138) target = $region32
    $region31: #{net_forward.3} parent=5 // pred_region
      %s142 = ssub.s32 %s9, 1
      %p143 = scmp.lt.s32.totalorder %s14, 1
      %s144 = scalar_select %p143, %s14, 1
      %s145 = smul.addr %s144, 100
      %s146 = smul.addr %s145, 8
      %s147 = scalar_lea.vmem %s0, %s146
      %p148 = pneg %p35
      %p149 = pneg %p32
      %p150 = pneg %p56
      %p151 = pneg %p53
      %p152 = pneg %p77
      %p153 = pneg %p74
      %p154 = pneg %p103
      %p155 = pneg %p100
      %p156 = scmp.lt.s32.totalorder %s14, 1
      %s157 = scalar_select %p156, %s14, 1
      %s158 = smul.addr %s157, 25
      %s159 = smul.addr %s158, 8
      %s160 = scalar_lea.vmem %s3, %s159
      %p161 = scmp.lt.s32.totalorder %s14, 1
      %s162 = scalar_select %p161, %s14, 1
      %s163 = smul.addr %s162, 100
      %s164 = smul.addr %s163, 8
      %s165 = scalar_lea.vmem %s0, %s164
      %p166 = scmp.lt.s32.totalorder %s14, 1
      %s167 = scalar_select %p166, %s14, 1
      %s168 = smul.addr %s167, 25
      %s169 = smul.addr %s168, 8
      %s170 = scalar_lea.vmem %s3, %s169
      %v171 = vld [vmem:[%s1] sm:$0xff]
      %v172 = vld [vmem:[%s1 + $0x8] sm:$0xff]
      %v173 = vld [vmem:[%s1 + $0x10] sm:$0xff]
      %v174 = vld [vmem:[%s1 + $0x18] sm:$0xff]
      %v175 = vld [vmem:[%s1 + $0x20] sm:$0xff]
      %v176 = vld [vmem:[%s1 + $0x28] sm:$0xff]
      %v177 = vld [vmem:[%s1 + $0x30] sm:$0xff]
      %v178 = vld [vmem:[%s1 + $0x38] sm:$0xff]
      %v179 = vld [vmem:[%s1 + $0x40] sm:$0xff]
      %v180 = vld [vmem:[%s1 + $0x48] sm:$0x7]
      %v181 = vld [vmem:[%s165] sm:$0xff]
      %v182 = vld [vmem:[%s165 + $0x8] sm:$0xff]
      %v183 = vld [vmem:[%s165 + $0x10] sm:$0xff]
      %v184 = vld [vmem:[%s165 + $0x18] sm:$0xff]
      %v185 = vld [vmem:[%s165 + $0x20] sm:$0xff]
      %v186 = vld [vmem:[%s165 + $0x28] sm:$0xff]
      %v187 = vld [vmem:[%s165 + $0x30] sm:$0xff]
      %v188 = vld [vmem:[%s165 + $0x38] sm:$0xff]
      %v189 = vld [vmem:[%s165 + $0x40] sm:$0xff]
      %v190 = vld [vmem:[%s165 + $0x48] sm:$0xff]
      %v191 = vld [vmem:[%s165 + $0x50] sm:$0xff]
      %v192 = vld [vmem:[%s165 + $0x58] sm:$0xff]
      %v193 = vld [vmem:[%s165 + $0x60] sm:$0xff]
      %v194 = vld [vmem:[%s165 + $0x68] sm:$0xff]
      %v195 = vld [vmem:[%s165 + $0x70] sm:$0xff]
      %v196 = vld [vmem:[%s165 + $0x78] sm:$0xff]
      %v197 = vld [vmem:[%s165 + $0x80] sm:$0xff]
      %v198 = vld [vmem:[%s165 + $0x88] sm:$0xff]
      %v199 = vld [vmem:[%s165 + $0x90] sm:$0xff]
      %v200 = vld [vmem:[%s165 + $0x98] sm:$0xff]
      %v201 = vld [vmem:[%s165 + $0xa0] sm:$0xff]
      %v202 = vld [vmem:[%s165 + $0xa8] sm:$0xff]
      %v203 = vld [vmem:[%s165 + $0xb0] sm:$0xff]
      %v204 = vld [vmem:[%s165 + $0xb8] sm:$0xff]
      %v205 = vld [vmem:[%s165 + $0xc0] sm:$0xf]
      %vm206 = vcmask 613376
      %v208 = vsel %vm206, %v181, 0
      %v211 = vsel %vm206, %v182, 0
      %v214 = vsel %vm206, %v183, 0
      %v217 = vsel %vm206, %v184, 0
      %v220 = vsel %vm206, %v185, 0
      %v223 = vsel %vm206, %v186, 0
      %v226 = vsel %vm206, %v187, 0
      %v229 = vsel %vm206, %v188, 0
      %v232 = vsel %vm206, %v189, 0
      %v235 = vsel %vm206, %v190, 0
      %v238 = vsel %vm206, %v191, 0
      %v241 = vsel %vm206, %v192, 0
      %v244 = vsel %vm206, %v193, 0
      %v247 = vsel %vm206, %v194, 0
      %v250 = vsel %vm206, %v195, 0
      %v253 = vsel %vm206, %v196, 0
      %v256 = vsel %vm206, %v197, 0
      %v259 = vsel %vm206, %v198, 0
      %v262 = vsel %vm206, %v199, 0
      %v265 = vsel %vm206, %v200, 0
      %v268 = vsel %vm206, %v201, 0
      %v271 = vsel %vm206, %v202, 0
      %v274 = vsel %vm206, %v203, 0
      %v277 = vsel %vm206, %v204, 0
      %v280 = vsel %vm206, %v205, 0
      %vm282 = vcmask 1042432
      %v284 = vsel %vm282, %v180, 0
      %286 = vmatprep.subr.mxu0 0.0
      %287 = vmatpush1.msra.mxu0 %v171
      %288 = vmatprep.subr.mxu0 0.0
      %289 = vmatpush1.msra.mxu0 %v172
      %290 = vmatprep.subr.mxu0 0.0
      %291 = vmatpush1.msra.mxu0 %v173
      %292 = vmatprep.subr.mxu0 0.0
      %293 = vmatpush1.msra.mxu0 %v174
      %294 = vmatprep.subr.mxu0 0.0
      %295 = vmatpush1.msra.mxu0 %v175
      %296 = vmatprep.subr.mxu0 0.0
      %297 = vmatpush1.msra.mxu0 %v176
      %298 = vmatprep.subr.mxu0 0.0
      %299 = vmatpush1.msra.mxu0 %v177
      %300 = vmatprep.subr.mxu0 0.0
      %301 = vmatpush1.msra.mxu0 %v178
      %302 = vmatprep.subr.mxu0 0.0
      %303 = vmatpush1.msra.mxu0 %v179
      %304 = vmatprep.subr.mxu0 0.0
      %305 = vmatpush1.msra.mxu0 %v284
      %306 = vmatprep.subr.mxu0 0.0
      %307 = vmatpush1.msra.mxu0 0.0
      %308 = vmatprep.subr.mxu0 0.0
      %309 = vmatpush1.msra.mxu0 0.0
      %310 = vmatprep.subr.mxu0 0.0
      %311 = vmatpush1.msra.mxu0 0.0
      %312 = vmatprep.subr.mxu0 0.0
      %313 = vmatpush1.msra.mxu0 0.0
      %314 = vmatprep.subr.mxu0 0.0
      %315 = vmatpush1.msra.mxu0 0.0
      %316 = vmatprep.subr.mxu0 0.0
      %317 = vmatpush1.msra.mxu0 0.0
      %318 = vmatprep.subr.mxu0 0.0
      %319 = vmatpush1.msra.mxu0 0.0
      %320 = vmatprep.subr.mxu0 0.0
      %321 = vmatpush1.msra.mxu0 0.0
      %322 = vmatprep.subr.mxu0 0.0
      %323 = vmatpush1.msra.mxu0 0.0
      %324 = vmatprep.subr.mxu0 0.0
      %325 = vmatpush1.msra.mxu0 0.0
      %326 = vmatprep.subr.mxu0 0.0
      %327 = vmatpush1.msra.mxu0 0.0
      %328 = vmatprep.subr.mxu0 0.0
      %329 = vmatpush1.msra.mxu0 0.0
      %330 = vmatprep.subr.mxu0 0.0
      %331 = vmatpush1.msra.mxu0 0.0
      %332 = vmatprep.subr.mxu0 0.0
      %333 = vmatpush1.msra.mxu0 0.0
      %334 = vmatprep.subr.mxu0 0.0
      %335 = vmatpush1.msra.mxu0 0.0
      %336 = vmatprep.subr.mxu0 0.0
      %337 = vmatpush1.msra.mxu0 0.0
      %338 = vmatprep.subr.mxu0 0.0
      %339 = vmatpush1.msra.mxu0 0.0
      %340 = vmatprep.subr.mxu0 0.0
      %341 = vmatpush1.msra.mxu0 0.0
      %342 = vmatprep.subr.mxu0 0.0
      %343 = vmatpush1.msra.mxu0 0.0
      %344 = vmatprep.subr.mxu0 0.0
      %345 = vmatpush1.msra.mxu0 0.0
      %346 = vmatprep.subr.mxu0 0.0
      %347 = vmatpush1.msra.mxu0 0.0
      %348 = vmatprep.subr.mxu0 0.0
      %349 = vmatpush1.msra.mxu0 0.0
      %350 = vmatprep.mubr.f32.mxu0 0.0
      %351 = vmatmul.mubr.f32.gmra.mrb[0].mxu0 %v208
      %v352 = vpop.f32.mrb[0].mxu0
      %v353 = vadd.f32 0.0, %v352
      %v354 = vpop.f32.mrb[0].mxu0
      %355 = vmatprep.mubr.f32.mxu0 0.0
      %356 = vmatmul.mubr.f32.gmra.mrb[0].mxu0 %v211
      %v357 = vpop.f32.mrb[0].mxu0
      %v358 = vadd.f32 0.0, %v357
      %v359 = vpop.f32.mrb[0].mxu0
      %360 = vmatprep.mubr.f32.mxu0 0.0
      %361 = vmatmul.mubr.f32.gmra.mrb[0].mxu0 %v214
      %v362 = vpop.f32.mrb[0].mxu0
      %v363 = vadd.f32 0.0, %v362
      %v364 = vpop.f32.mrb[0].mxu0
      %365 = vmatprep.mubr.f32.mxu0 0.0
      %366 = vmatmul.mubr.f32.gmra.mrb[0].mxu0 %v217
      %v367 = vpop.f32.mrb[0].mxu0
      %v368 = vadd.f32 0.0, %v367
      %v369 = vpop.f32.mrb[0].mxu0
      %370 = vmatprep.mubr.f32.mxu0 0.0
      %371 = vmatmul.mubr.f32.gmra.mrb[0].mxu0 %v220
      %v372 = vpop.f32.mrb[0].mxu0
      %v373 = vadd.f32 0.0, %v372
      %v374 = vpop.f32.mrb[0].mxu0
      %375 = vmatprep.mubr.f32.mxu0 0.0
      %376 = vmatmul.mubr.f32.gmra.mrb[0].mxu0 %v223
      %v377 = vpop.f32.mrb[0].mxu0
      %v378 = vadd.f32 0.0, %v377
      %v379 = vpop.f32.mrb[0].mxu0
      %380 = vmatprep.mubr.f32.mxu0 0.0
      %381 = vmatmul.mubr.f32.gmra.mrb[0].mxu0 %v226
      %v382 = vpop.f32.mrb[0].mxu0
      %v383 = vadd.f32 0.0, %v382
      %v384 = vpop.f32.mrb[0].mxu0
      %385 = vmatprep.mubr.f32.mxu0 0.0
      %386 = vmatmul.mubr.f32.gmra.mrb[0].mxu0 %v229
      %v387 = vpop.f32.mrb[0].mxu0
      %v388 = vadd.f32 0.0, %v387
      %v389 = vpop.f32.mrb[0].mxu0
      %390 = vmatprep.mubr.f32.mxu0 0.0
      %391 = vmatmul.mubr.f32.gmra.mrb[0].mxu0 %v232
      %v392 = vpop.f32.mrb[0].mxu0
      %v393 = vadd.f32 0.0, %v392
      %v394 = vpop.f32.mrb[0].mxu0
      %395 = vmatprep.mubr.f32.mxu0 0.0
      %396 = vmatmul.mubr.f32.gmra.mrb[0].mxu0 %v235
      %v397 = vpop.f32.mrb[0].mxu0
      %v398 = vadd.f32 0.0, %v397
      %v399 = vpop.f32.mrb[0].mxu0
      %400 = vmatprep.mubr.f32.mxu0 0.0
      %401 = vmatmul.mubr.f32.gmra.mrb[0].mxu0 %v238
      %v402 = vpop.f32.mrb[0].mxu0
      %v403 = vadd.f32 0.0, %v402
      %v404 = vpop.f32.mrb[0].mxu0
      %405 = vmatprep.mubr.f32.mxu0 0.0
      %406 = vmatmul.mubr.f32.gmra.mrb[0].mxu0 %v241
      %v407 = vpop.f32.mrb[0].mxu0
      %v408 = vadd.f32 0.0, %v407
      %v409 = vpop.f32.mrb[0].mxu0
      %410 = vmatprep.mubr.f32.mxu0 0.0
      %411 = vmatmul.mubr.f32.gmra.mrb[0].mxu0 %v244
      %v412 = vpop.f32.mrb[0].mxu0
      %v413 = vadd.f32 0.0, %v412
      %v414 = vpop.f32.mrb[0].mxu0
      %415 = vmatprep.mubr.f32.mxu0 0.0
      %416 = vmatmul.mubr.f32.gmra.mrb[0].mxu0 %v247
      %v417 = vpop.f32.mrb[0].mxu0
      %v418 = vadd.f32 0.0, %v417
      %v419 = vpop.f32.mrb[0].mxu0
      %420 = vmatprep.mubr.f32.mxu0 0.0
      %421 = vmatmul.mubr.f32.gmra.mrb[0].mxu0 %v250
      %v422 = vpop.f32.mrb[0].mxu0
      %v423 = vadd.f32 0.0, %v422
      %v424 = vpop.f32.mrb[0].mxu0
      %425 = vmatprep.mubr.f32.mxu0 0.0
      %426 = vmatmul.mubr.f32.gmra.mrb[0].mxu0 %v253
      %v427 = vpop.f32.mrb[0].mxu0
      %v428 = vadd.f32 0.0, %v427
      %v429 = vpop.f32.mrb[0].mxu0
      %430 = vmatprep.mubr.f32.mxu0 0.0
      %431 = vmatmul.mubr.f32.gmra.mrb[0].mxu0 %v256
      %v432 = vpop.f32.mrb[0].mxu0
      %v433 = vadd.f32 0.0, %v432
      %v434 = vpop.f32.mrb[0].mxu0
      %435 = vmatprep.mubr.f32.mxu0 0.0
      %436 = vmatmul.mubr.f32.gmra.mrb[0].mxu0 %v259
      %v437 = vpop.f32.mrb[0].mxu0
      %v438 = vadd.f32 0.0, %v437
      %v439 = vpop.f32.mrb[0].mxu0
      %440 = vmatprep.mubr.f32.mxu0 0.0
      %441 = vmatmul.mubr.f32.gmra.mrb[0].mxu0 %v262
      %v442 = vpop.f32.mrb[0].mxu0
      %v443 = vadd.f32 0.0, %v442
      %v444 = vpop.f32.mrb[0].mxu0
      %445 = vmatprep.mubr.f32.mxu0 0.0
      %446 = vmatmul.mubr.f32.gmra.mrb[0].mxu0 %v265
      %v447 = vpop.f32.mrb[0].mxu0
      %v448 = vadd.f32 0.0, %v447
      %v449 = vpop.f32.mrb[0].mxu0
      %450 = vmatprep.mubr.f32.mxu0 0.0
      %451 = vmatmul.mubr.f32.gmra.mrb[0].mxu0 %v268
      %v452 = vpop.f32.mrb[0].mxu0
      %v453 = vadd.f32 0.0, %v452
      %v454 = vpop.f32.mrb[0].mxu0
      %455 = vmatprep.mubr.f32.mxu0 0.0
      %456 = vmatmul.mubr.f32.gmra.mrb[0].mxu0 %v271
      %v457 = vpop.f32.mrb[0].mxu0
      %v458 = vadd.f32 0.0, %v457
      %v459 = vpop.f32.mrb[0].mxu0
      %460 = vmatprep.mubr.f32.mxu0 0.0
      %461 = vmatmul.mubr.f32.gmra.mrb[0].mxu0 %v274
      %v462 = vpop.f32.mrb[0].mxu0
      %v463 = vadd.f32 0.0, %v462
      %v464 = vpop.f32.mrb[0].mxu0
      %465 = vmatprep.mubr.f32.mxu0 0.0
      %466 = vmatmul.mubr.f32.gmra.mrb[0].mxu0 %v277
      %v467 = vpop.f32.mrb[0].mxu0
      %v468 = vadd.f32 0.0, %v467
      %v469 = vpop.f32.mrb[0].mxu0
      %470 = vmatprep.mubr.f32.mxu0 0.0
      %471 = vmatmul.mubr.f32.gmra.mrb[0].mxu0 %v280
      %v472 = vpop.f32.mrb[0].mxu0
      %v473 = vadd.f32 0.0, %v472
      %v474 = vpop.f32.mrb[0].mxu0
      %475 = vdwg.mxu0
      %s476 = scalar_lea.vmem %s165, 200
      %v477 = vld [vmem:[%s476] sm:$0xff]
      %v478 = vld [vmem:[%s476 + $0x8] sm:$0xff]
      %v479 = vld [vmem:[%s476 + $0x10] sm:$0xff]
      %v480 = vld [vmem:[%s476 + $0x18] sm:$0xff]
      %v481 = vld [vmem:[%s476 + $0x20] sm:$0xff]
      %v482 = vld [vmem:[%s476 + $0x28] sm:$0xff]
      %v483 = vld [vmem:[%s476 + $0x30] sm:$0xff]
      %v484 = vld [vmem:[%s476 + $0x38] sm:$0xff]
      %v485 = vld [vmem:[%s476 + $0x40] sm:$0xff]
      %v486 = vld [vmem:[%s476 + $0x48] sm:$0xff]
      %v487 = vld [vmem:[%s476 + $0x50] sm:$0xff]
      %v488 = vld [vmem:[%s476 + $0x58] sm:$0xff]
      %v489 = vld [vmem:[%s476 + $0x60] sm:$0xff]
      %v490 = vld [vmem:[%s476 + $0x68] sm:$0xff]
      %v491 = vld [vmem:[%s476 + $0x70] sm:$0xff]
      %v492 = vld [vmem:[%s476 + $0x78] sm:$0xff]
      %v493 = vld [vmem:[%s476 + $0x80] sm:$0xff]
      %v494 = vld [vmem:[%s476 + $0x88] sm:$0xff]
      %v495 = vld [vmem:[%s476 + $0x90] sm:$0xff]
      %v496 = vld [vmem:[%s476 + $0x98] sm:$0xff]
      %v497 = vld [vmem:[%s476 + $0xa0] sm:$0xff]
      %v498 = vld [vmem:[%s476 + $0xa8] sm:$0xff]
      %v499 = vld [vmem:[%s476 + $0xb0] sm:$0xff]
      %v500 = vld [vmem:[%s476 + $0xb8] sm:$0xff]
      %v501 = vld [vmem:[%s476 + $0xc0] sm:$0xf]
      %v503 = vsel %vm206, %v477, 0
      %v506 = vsel %vm206, %v478, 0
      %v509 = vsel %vm206, %v479, 0
      %v512 = vsel %vm206, %v480, 0
      %v515 = vsel %vm206, %v481, 0
      %v518 = vsel %vm206, %v482, 0
      %v521 = vsel %vm206, %v483, 0
      %v524 = vsel %vm206, %v484, 0
      %v527 = vsel %vm206, %v485, 0
      %v530 = vsel %vm206, %v486, 0
      %v533 = vsel %vm206, %v487, 0
      %v536 = vsel %vm206, %v488, 0
      %v539 = vsel %vm206, %v489, 0
      %v542 = vsel %vm206, %v490, 0
      %v545 = vsel %vm206, %v491, 0
      %v548 = vsel %vm206, %v492, 0
      %v551 = vsel %vm206, %v493, 0
      %v554 = vsel %vm206, %v494, 0
      %v557 = vsel %vm206, %v495, 0
      %v560 = vsel %vm206, %v496, 0
      %v563 = vsel %vm206, %v497, 0
      %v566 = vsel %vm206, %v498, 0
      %v569 = vsel %vm206, %v499, 0
      %v572 = vsel %vm206, %v500, 0
      %v575 = vsel %vm206, %v501, 0
      %577 = vmatprep.subr.mxu0 0.0
      %578 = vmatpush1.msra.mxu0 %v171
      %579 = vmatprep.subr.mxu0 0.0
      %580 = vmatpush1.msra.mxu0 %v172
      %581 = vmatprep.subr.mxu0 0.0
      %582 = vmatpush1.msra.mxu0 %v173
      %583 = vmatprep.subr.mxu0 0.0
      %584 = vmatpush1.msra.mxu0 %v174
      %585 = vmatprep.subr.mxu0 0.0
      %586 = vmatpush1.msra.mxu0 %v175
      %587 = vmatprep.subr.mxu0 0.0
      %588 = vmatpush1.msra.mxu0 %v176
      %589 = vmatprep.subr.mxu0 0.0
      %590 = vmatpush1.msra.mxu0 %v177
      %591 = vmatprep.subr.mxu0 0.0
      %592 = vmatpush1.msra.mxu0 %v178
      %593 = vmatprep.subr.mxu0 0.0
      %594 = vmatpush1.msra.mxu0 %v179
      %595 = vmatprep.subr.mxu0 0.0
      %596 = vmatpush1.msra.mxu0 %v284
      %597 = vmatprep.subr.mxu0 0.0
      %598 = vmatpush1.msra.mxu0 0.0
      %599 = vmatprep.subr.mxu0 0.0
      %600 = vmatpush1.msra.mxu0 0.0
      %601 = vmatprep.subr.mxu0 0.0
      %602 = vmatpush1.msra.mxu0 0.0
      %603 = vmatprep.subr.mxu0 0.0
      %604 = vmatpush1.msra.mxu0 0.0
      %605 = vmatprep.subr.mxu0 0.0
      %606 = vmatpush1.msra.mxu0 0.0
      %607 = vmatprep.subr.mxu0 0.0
      %608 = vmatpush1.msra.mxu0 0.0
      %609 = vmatprep.subr.mxu0 0.0
      %610 = vmatpush1.msra.mxu0 0.0
      %611 = vmatprep.subr.mxu0 0.0
      %612 = vmatpush1.msra.mxu0 0.0
      %613 = vmatprep.subr.mxu0 0.0
      %614 = vmatpush1.msra.mxu0 0.0
      %615 = vmatprep.subr.mxu0 0.0
      %616 = vmatpush1.msra.mxu0 0.0
      %617 = vmatprep.subr.mxu0 0.0
      %618 = vmatpush1.msra.mxu0 0.0
      %619 = vmatprep.subr.mxu0 0.0
      %620 = vmatpush1.msra.mxu0 0.0
      %621 = vmatprep.subr.mxu0 0.0
      %622 = vmatpush1.msra.mxu0 0.0
      %623 = vmatprep.subr.mxu0 0.0
      %624 = vmatpush1.msra.mxu0 0.0
      %625 = vmatprep.subr.mxu0 0.0
      %626 = vmatpush1.msra.mxu0 0.0
      %627 = vmatprep.subr.mxu0 0.0
      %628 = vmatpush1.msra.mxu0 0.0
      %629 = vmatprep.subr.mxu0 0.0
      %630 = vmatpush1.msra.mxu0 0.0
      %631 = vmatprep.subr.mxu0 0.0
      %632 = vmatpush1.msra.mxu0 0.0
      %633 = vmatprep.subr.mxu0 0.0
      %634 = vmatpush1.msra.mxu0 0.0
      %635 = vmatprep.subr.mxu0 0.0
      %636 = vmatpush1.msra.mxu0 0.0
      %637 = vmatprep.subr.mxu0 0.0
      %638 = vmatpush1.msra.mxu0 0.0
      %639 = vmatprep.subr.mxu0 0.0
      %640 = vmatpush1.msra.mxu0 0.0
      %641 = vmatprep.mubr.f32.mxu0 0.0
      %642 = vmatmul.mubr.f32.gmra.mrb[0].mxu0 %v503
      %v643 = vpop.f32.mrb[0].mxu0
      %v644 = vadd.f32 0.0, %v643
      %v645 = vpop.f32.mrb[0].mxu0
      %646 = vmatprep.mubr.f32.mxu0 0.0
      %647 = vmatmul.mubr.f32.gmra.mrb[0].mxu0 %v506
      %v648 = vpop.f32.mrb[0].mxu0
      %v649 = vadd.f32 0.0, %v648
      %v650 = vpop.f32.mrb[0].mxu0
      %651 = vmatprep.mubr.f32.mxu0 0.0
      %652 = vmatmul.mubr.f32.gmra.mrb[0].mxu0 %v509
      %v653 = vpop.f32.mrb[0].mxu0
      %v654 = vadd.f32 0.0, %v653
      %v655 = vpop.f32.mrb[0].mxu0
      %656 = vmatprep.mubr.f32.mxu0 0.0
      %657 = vmatmul.mubr.f32.gmra.mrb[0].mxu0 %v512
      %v658 = vpop.f32.mrb[0].mxu0
      %v659 = vadd.f32 0.0, %v658
      %v660 = vpop.f32.mrb[0].mxu0
      %661 = vmatprep.mubr.f32.mxu0 0.0
      %662 = vmatmul.mubr.f32.gmra.mrb[0].mxu0 %v515
      %v663 = vpop.f32.mrb[0].mxu0
      %v664 = vadd.f32 0.0, %v663
      %v665 = vpop.f32.mrb[0].mxu0
      %666 = vmatprep.mubr.f32.mxu0 0.0
      %667 = vmatmul.mubr.f32.gmra.mrb[0].mxu0 %v518
      %v668 = vpop.f32.mrb[0].mxu0
      %v669 = vadd.f32 0.0, %v668
      %v670 = vpop.f32.mrb[0].mxu0
      %671 = vmatprep.mubr.f32.mxu0 0.0
      %672 = vmatmul.mubr.f32.gmra.mrb[0].mxu0 %v521
      %v673 = vpop.f32.mrb[0].mxu0
      %v674 = vadd.f32 0.0, %v673
      %v675 = vpop.f32.mrb[0].mxu0
      %676 = vmatprep.mubr.f32.mxu0 0.0
      %677 = vmatmul.mubr.f32.gmra.mrb[0].mxu0 %v524
      %v678 = vpop.f32.mrb[0].mxu0
      %v679 = vadd.f32 0.0, %v678
      %v680 = vpop.f32.mrb[0].mxu0
      %681 = vmatprep.mubr.f32.mxu0 0.0
      %682 = vmatmul.mubr.f32.gmra.mrb[0].mxu0 %v527
      %v683 = vpop.f32.mrb[0].mxu0
      %v684 = vadd.f32 0.0, %v683
      %v685 = vpop.f32.mrb[0].mxu0
      %686 = vmatprep.mubr.f32.mxu0 0.0
      %687 = vmatmul.mubr.f32.gmra.mrb[0].mxu0 %v530
      %v688 = vpop.f32.mrb[0].mxu0
      %v689 = vadd.f32 0.0, %v688
      %v690 = vpop.f32.mrb[0].mxu0
      %691 = vmatprep.mubr.f32.mxu0 0.0
      %692 = vmatmul.mubr.f32.gmra.mrb[0].mxu0 %v533
      %v693 = vpop.f32.mrb[0].mxu0
      %v694 = vadd.f32 0.0, %v693
      %v695 = vpop.f32.mrb[0].mxu0
      %696 = vmatprep.mubr.f32.mxu0 0.0
      %697 = vmatmul.mubr.f32.gmra.mrb[0].mxu0 %v536
      %v698 = vpop.f32.mrb[0].mxu0
      %v699 = vadd.f32 0.0, %v698
      %v700 = vpop.f32.mrb[0].mxu0
      %701 = vmatprep.mubr.f32.mxu0 0.0
      %702 = vmatmul.mubr.f32.gmra.mrb[0].mxu0 %v539
      %v703 = vpop.f32.mrb[0].mxu0
      %v704 = vadd.f32 0.0, %v703
      %v705 = vpop.f32.mrb[0].mxu0
      %706 = vmatprep.mubr.f32.mxu0 0.0
      %707 = vmatmul.mubr.f32.gmra.mrb[0].mxu0 %v542
      %v708 = vpop.f32.mrb[0].mxu0
      %v709 = vadd.f32 0.0, %v708
      %v710 = vpop.f32.mrb[0].mxu0
      %711 = vmatprep.mubr.f32.mxu0 0.0
      %712 = vmatmul.mubr.f32.gmra.mrb[0].mxu0 %v545
      %v713 = vpop.f32.mrb[0].mxu0
      %v714 = vadd.f32 0.0, %v713
      %v715 = vpop.f32.mrb[0].mxu0
      %716 = vmatprep.mubr.f32.mxu0 0.0
      %717 = vmatmul.mubr.f32.gmra.mrb[0].mxu0 %v548
      %v718 = vpop.f32.mrb[0].mxu0
      %v719 = vadd.f32 0.0, %v718
      %v720 = vpop.f32.mrb[0].mxu0
      %721 = vmatprep.mubr.f32.mxu0 0.0
      %722 = vmatmul.mubr.f32.gmra.mrb[0].mxu0 %v551
      %v723 = vpop.f32.mrb[0].mxu0
      %v724 = vadd.f32 0.0, %v723
      %v725 = vpop.f32.mrb[0].mxu0
      %726 = vmatprep.mubr.f32.mxu0 0.0
      %727 = vmatmul.mubr.f32.gmra.mrb[0].mxu0 %v554
      %v728 = vpop.f32.mrb[0].mxu0
      %v729 = vadd.f32 0.0, %v728
      %v730 = vpop.f32.mrb[0].mxu0
      %731 = vmatprep.mubr.f32.mxu0 0.0
      %732 = vmatmul.mubr.f32.gmra.mrb[0].mxu0 %v557
      %v733 = vpop.f32.mrb[0].mxu0
      %v734 = vadd.f32 0.0, %v733
      %v735 = vpop.f32.mrb[0].mxu0
      %736 = vmatprep.mubr.f32.mxu0 0.0
      %737 = vmatmul.mubr.f32.gmra.mrb[0].mxu0 %v560
      %v738 = vpop.f32.mrb[0].mxu0
      %v739 = vadd.f32 0.0, %v738
      %v740 = vpop.f32.mrb[0].mxu0
      %741 = vmatprep.mubr.f32.mxu0 0.0
      %742 = vmatmul.mubr.f32.gmra.mrb[0].mxu0 %v563
      %v743 = vpop.f32.mrb[0].mxu0
      %v744 = vadd.f32 0.0, %v743
      %v745 = vpop.f32.mrb[0].mxu0
      %746 = vmatprep.mubr.f32.mxu0 0.0
      %747 = vmatmul.mubr.f32.gmra.mrb[0].mxu0 %v566
      %v748 = vpop.f32.mrb[0].mxu0
      %v749 = vadd.f32 0.0, %v748
      %v750 = vpop.f32.mrb[0].mxu0
      %751 = vmatprep.mubr.f32.mxu0 0.0
      %752 = vmatmul.mubr.f32.gmra.mrb[0].mxu0 %v569
      %v753 = vpop.f32.mrb[0].mxu0
      %v754 = vadd.f32 0.0, %v753
      %v755 = vpop.f32.mrb[0].mxu0
      %756 = vmatprep.mubr.f32.mxu0 0.0
      %757 = vmatmul.mubr.f32.gmra.mrb[0].mxu0 %v572
      %v758 = vpop.f32.mrb[0].mxu0
      %v759 = vadd.f32 0.0, %v758
      %v760 = vpop.f32.mrb[0].mxu0
      %761 = vmatprep.mubr.f32.mxu0 0.0
      %762 = vmatmul.mubr.f32.gmra.mrb[0].mxu0 %v575
      %v763 = vpop.f32.mrb[0].mxu0
      %v764 = vadd.f32 0.0, %v763
      %v765 = vpop.f32.mrb[0].mxu0
      %766 = vdwg.mxu0
      %v767 = vmax.f32 %v353, %v644
      %v768 = vmax.f32 %v358, %v649
      %v769 = vmax.f32 %v363, %v654
      %v770 = vmax.f32 %v368, %v659
      %v771 = vmax.f32 %v373, %v664
      %v772 = vmax.f32 %v378, %v669
      %v773 = vmax.f32 %v383, %v674
      %v774 = vmax.f32 %v388, %v679
      %v775 = vmax.f32 %v393, %v684
      %v776 = vmax.f32 %v398, %v689
      %v777 = vmax.f32 %v403, %v694
      %v778 = vmax.f32 %v408, %v699
      %v779 = vmax.f32 %v413, %v704
      %v780 = vmax.f32 %v418, %v709
      %v781 = vmax.f32 %v423, %v714
      %v782 = vmax.f32 %v428, %v719
      %v783 = vmax.f32 %v433, %v724
      %v784 = vmax.f32 %v438, %v729
      %v785 = vmax.f32 %v443, %v734
      %v786 = vmax.f32 %v448, %v739
      %v787 = vmax.f32 %v453, %v744
      %v788 = vmax.f32 %v458, %v749
      %v789 = vmax.f32 %v463, %v754
      %v790 = vmax.f32 %v468, %v759
      %v791 = vmax.f32 %v473, %v764
      %s792 = scalar_lea.vmem %s165, 400
      %v793 = vld [vmem:[%s792] sm:$0xff]
      %v794 = vld [vmem:[%s792 + $0x8] sm:$0xff]
      %v795 = vld [vmem:[%s792 + $0x10] sm:$0xff]
      %v796 = vld [vmem:[%s792 + $0x18] sm:$0xff]
      %v797 = vld [vmem:[%s792 + $0x20] sm:$0xff]
      %v798 = vld [vmem:[%s792 + $0x28] sm:$0xff]
      %v799 = vld [vmem:[%s792 + $0x30] sm:$0xff]
      %v800 = vld [vmem:[%s792 + $0x38] sm:$0xff]
      %v801 = vld [vmem:[%s792 + $0x40] sm:$0xff]
      %v802 = vld [vmem:[%s792 + $0x48] sm:$0xff]
      %v803 = vld [vmem:[%s792 + $0x50] sm:$0xff]
      %v804 = vld [vmem:[%s792 + $0x58] sm:$0xff]
      %v805 = vld [vmem:[%s792 + $0x60] sm:$0xff]
      %v806 = vld [vmem:[%s792 + $0x68] sm:$0xff]
      %v807 = vld [vmem:[%s792 + $0x70] sm:$0xff]
      %v808 = vld [vmem:[%s792 + $0x78] sm:$0xff]
      %v809 = vld [vmem:[%s792 + $0x80] sm:$0xff]
      %v810 = vld [vmem:[%s792 + $0x88] sm:$0xff]
      %v811 = vld [vmem:[%s792 + $0x90] sm:$0xff]
      %v812 = vld [vmem:[%s792 + $0x98] sm:$0xff]
      %v813 = vld [vmem:[%s792 + $0xa0] sm:$0xff]
      %v814 = vld [vmem:[%s792 + $0xa8] sm:$0xff]
      %v815 = vld [vmem:[%s792 + $0xb0] sm:$0xff]
      %v816 = vld [vmem:[%s792 + $0xb8] sm:$0xff]
      %v817 = vld [vmem:[%s792 + $0xc0] sm:$0xf]
      %v819 = vsel %vm206, %v793, 0
      %v822 = vsel %vm206, %v794, 0
      %v825 = vsel %vm206, %v795, 0
      %v828 = vsel %vm206, %v796, 0
      %v831 = vsel %vm206, %v797, 0
      %v834 = vsel %vm206, %v798, 0
      %v837 = vsel %vm206, %v799, 0
      %v840 = vsel %vm206, %v800, 0
      %v843 = vsel %vm206, %v801, 0
      %v846 = vsel %vm206, %v802, 0
      %v849 = vsel %vm206, %v803, 0
      %v852 = vsel %vm206, %v804, 0
      %v855 = vsel %vm206, %v805, 0
      %v858 = vsel %vm206, %v806, 0
      %v861 = vsel %vm206, %v807, 0
      %v864 = vsel %vm206, %v808, 0
      %v867 = vsel %vm206, %v809, 0
      %v870 = vsel %vm206, %v810, 0
      %v873 = vsel %vm206, %v811, 0
      %v876 = vsel %vm206, %v812, 0
      %v879 = vsel %vm206, %v813, 0
      %v882 = vsel %vm206, %v814, 0
      %v885 = vsel %vm206, %v815, 0
      %v888 = vsel %vm206, %v816, 0
      %v891 = vsel %vm206, %v817, 0
      %893 = vmatprep.subr.mxu0 0.0
      %894 = vmatpush1.msra.mxu0 %v171
      %895 = vmatprep.subr.mxu0 0.0
      %896 = vmatpush1.msra.mxu0 %v172
      %897 = vmatprep.subr.mxu0 0.0
      %898 = vmatpush1.msra.mxu0 %v173
      %899 = vmatprep.subr.mxu0 0.0
      %900 = vmatpush1.msra.mxu0 %v174
      %901 = vmatprep.subr.mxu0 0.0
      %902 = vmatpush1.msra.mxu0 %v175
      %903 = vmatprep.subr.mxu0 0.0
      %904 = vmatpush1.msra.mxu0 %v176
      %905 = vmatprep.subr.mxu0 0.0
      %906 = vmatpush1.msra.mxu0 %v177
      %907 = vmatprep.subr.mxu0 0.0
      %908 = vmatpush1.msra.mxu0 %v178
      %909 = vmatprep.subr.mxu0 0.0
      %910 = vmatpush1.msra.mxu0 %v179
      %911 = vmatprep.subr.mxu0 0.0
      %912 = vmatpush1.msra.mxu0 %v284
      %913 = vmatprep.subr.mxu0 0.0
      %914 = vmatpush1.msra.mxu0 0.0
      %915 = vmatprep.subr.mxu0 0.0
      %916 = vmatpush1.msra.mxu0 0.0
      %917 = vmatprep.subr.mxu0 0.0
      %918 = vmatpush1.msra.mxu0 0.0
      %919 = vmatprep.subr.mxu0 0.0
      %920 = vmatpush1.msra.mxu0 0.0
      %921 = vmatprep.subr.mxu0 0.0
      %922 = vmatpush1.msra.mxu0 0.0
      %923 = vmatprep.subr.mxu0 0.0
      %924 = vmatpush1.msra.mxu0 0.0
      %925 = vmatprep.subr.mxu0 0.0
      %926 = vmatpush1.msra.mxu0 0.0
      %927 = vmatprep.subr.mxu0 0.0
      %928 = vmatpush1.msra.mxu0 0.0
      %929 = vmatprep.subr.mxu0 0.0
      %930 = vmatpush1.msra.mxu0 0.0
      %931 = vmatprep.subr.mxu0 0.0
      %932 = vmatpush1.msra.mxu0 0.0
      %933 = vmatprep.subr.mxu0 0.0
      %934 = vmatpush1.msra.mxu0 0.0
      %935 = vmatprep.subr.mxu0 0.0
      %936 = vmatpush1.msra.mxu0 0.0
      %937 = vmatprep.subr.mxu0 0.0
      %938 = vmatpush1.msra.mxu0 0.0
      %939 = vmatprep.subr.mxu0 0.0
      %940 = vmatpush1.msra.mxu0 0.0
      %941 = vmatprep.subr.mxu0 0.0
      %942 = vmatpush1.msra.mxu0 0.0
      %943 = vmatprep.subr.mxu0 0.0
      %944 = vmatpush1.msra.mxu0 0.0
      %945 = vmatprep.subr.mxu0 0.0
      %946 = vmatpush1.msra.mxu0 0.0
      %947 = vmatprep.subr.mxu0 0.0
      %948 = vmatpush1.msra.mxu0 0.0
      %949 = vmatprep.subr.mxu0 0.0
      %950 = vmatpush1.msra.mxu0 0.0
      %951 = vmatprep.subr.mxu0 0.0
      %952 = vmatpush1.msra.mxu0 0.0
      %953 = vmatprep.subr.mxu0 0.0
      %954 = vmatpush1.msra.mxu0 0.0
      %955 = vmatprep.subr.mxu0 0.0
      %956 = vmatpush1.msra.mxu0 0.0
      %957 = vmatprep.mubr.f32.mxu0 0.0
      %958 = vmatmul.mubr.f32.gmra.mrb[0].mxu0 %v819
      %v959 = vpop.f32.mrb[0].mxu0
      %v960 = vadd.f32 0.0, %v959
      %v961 = vpop.f32.mrb[0].mxu0
      %962 = vmatprep.mubr.f32.mxu0 0.0
      %963 = vmatmul.mubr.f32.gmra.mrb[0].mxu0 %v822
      %v964 = vpop.f32.mrb[0].mxu0
      %v965 = vadd.f32 0.0, %v964
      %v966 = vpop.f32.mrb[0].mxu0
      %967 = vmatprep.mubr.f32.mxu0 0.0
      %968 = vmatmul.mubr.f32.gmra.mrb[0].mxu0 %v825
      %v969 = vpop.f32.mrb[0].mxu0
      %v970 = vadd.f32 0.0, %v969
      %v971 = vpop.f32.mrb[0].mxu0
      %972 = vmatprep.mubr.f32.mxu0 0.0
      %973 = vmatmul.mubr.f32.gmra.mrb[0].mxu0 %v828
      %v974 = vpop.f32.mrb[0].mxu0
      %v975 = vadd.f32 0.0, %v974
      %v976 = vpop.f32.mrb[0].mxu0
      %977 = vmatprep.mubr.f32.mxu0 0.0
      %978 = vmatmul.mubr.f32.gmra.mrb[0].mxu0 %v831
      %v979 = vpop.f32.mrb[0].mxu0
      %v980 = vadd.f32 0.0, %v979
      %v981 = vpop.f32.mrb[0].mxu0
      %982 = vmatprep.mubr.f32.mxu0 0.0
      %983 = vmatmul.mubr.f32.gmra.mrb[0].mxu0 %v834
      %v984 = vpop.f32.mrb[0].mxu0
      %v985 = vadd.f32 0.0, %v984
      %v986 = vpop.f32.mrb[0].mxu0
      %987 = vmatprep.mubr.f32.mxu0 0.0
      %988 = vmatmul.mubr.f32.gmra.mrb[0].mxu0 %v837
      %v989 = vpop.f32.mrb[0].mxu0
      %v990 = vadd.f32 0.0, %v989
      %v991 = vpop.f32.mrb[0].mxu0
      %992 = vmatprep.mubr.f32.mxu0 0.0
      %993 = vmatmul.mubr.f32.gmra.mrb[0].mxu0 %v840
      %v994 = vpop.f32.mrb[0].mxu0
      %v995 = vadd.f32 0.0, %v994
      %v996 = vpop.f32.mrb[0].mxu0
      %997 = vmatprep.mubr.f32.mxu0 0.0
      %998 = vmatmul.mubr.f32.gmra.mrb[0].mxu0 %v843
      %v999 = vpop.f32.mrb[0].mxu0
      %v1000 = vadd.f32 0.0, %v999
      %v1001 = vpop.f32.mrb[0].mxu0
      %1002 = vmatprep.mubr.f32.mxu0 0.0
      %1003 = vmatmul.mubr.f32.gmra.mrb[0].mxu0 %v846
      %v1004 = vpop.f32.mrb[0].mxu0
      %v1005 = vadd.f32 0.0, %v1004
      %v1006 = vpop.f32.mrb[0].mxu0
      %1007 = vmatprep.mubr.f32.mxu0 0.0
      %1008 = vmatmul.mubr.f32.gmra.mrb[0].mxu0 %v849
      %v1009 = vpop.f32.mrb[0].mxu0
      %v1010 = vadd.f32 0.0, %v1009
      %v1011 = vpop.f32.mrb[0].mxu0
      %1012 = vmatprep.mubr.f32.mxu0 0.0
      %1013 = vmatmul.mubr.f32.gmra.mrb[0].mxu0 %v852
      %v1014 = vpop.f32.mrb[0].mxu0
      %v1015 = vadd.f32 0.0, %v1014
      %v1016 = vpop.f32.mrb[0].mxu0
      %1017 = vmatprep.mubr.f32.mxu0 0.0
      %1018 = vmatmul.mubr.f32.gmra.mrb[0].mxu0 %v855
      %v1019 = vpop.f32.mrb[0].mxu0
      %v1020 = vadd.f32 0.0, %v1019
      %v1021 = vpop.f32.mrb[0].mxu0
      %1022 = vmatprep.mubr.f32.mxu0 0.0
      %1023 = vmatmul.mubr.f32.gmra.mrb[0].mxu0 %v858
      %v1024 = vpop.f32.mrb[0].mxu0
      %v1025 = vadd.f32 0.0, %v1024
      %v1026 = vpop.f32.mrb[0].mxu0
      %1027 = vmatprep.mubr.f32.mxu0 0.0
      %1028 = vmatmul.mubr.f32.gmra.mrb[0].mxu0 %v861
      %v1029 = vpop.f32.mrb[0].mxu0
      %v1030 = vadd.f32 0.0, %v1029
      %v1031 = vpop.f32.mrb[0].mxu0
      %1032 = vmatprep.mubr.f32.mxu0 0.0
      %1033 = vmatmul.mubr.f32.gmra.mrb[0].mxu0 %v864
      %v1034 = vpop.f32.mrb[0].mxu0
      %v1035 = vadd.f32 0.0, %v1034
      %v1036 = vpop.f32.mrb[0].mxu0
      %1037 = vmatprep.mubr.f32.mxu0 0.0
      %1038 = vmatmul.mubr.f32.gmra.mrb[0].mxu0 %v867
      %v1039 = vpop.f32.mrb[0].mxu0
      %v1040 = vadd.f32 0.0, %v1039
      %v1041 = vpop.f32.mrb[0].mxu0
      %1042 = vmatprep.mubr.f32.mxu0 0.0
      %1043 = vmatmul.mubr.f32.gmra.mrb[0].mxu0 %v870
      %v1044 = vpop.f32.mrb[0].mxu0
      %v1045 = vadd.f32 0.0, %v1044
      %v1046 = vpop.f32.mrb[0].mxu0
      %1047 = vmatprep.mubr.f32.mxu0 0.0
      %1048 = vmatmul.mubr.f32.gmra.mrb[0].mxu0 %v873
      %v1049 = vpop.f32.mrb[0].mxu0
      %v1050 = vadd.f32 0.0, %v1049
      %v1051 = vpop.f32.mrb[0].mxu0
      %1052 = vmatprep.mubr.f32.mxu0 0.0
      %1053 = vmatmul.mubr.f32.gmra.mrb[0].mxu0 %v876
      %v1054 = vpop.f32.mrb[0].mxu0
      %v1055 = vadd.f32 0.0, %v1054
      %v1056 = vpop.f32.mrb[0].mxu0
      %1057 = vmatprep.mubr.f32.mxu0 0.0
      %1058 = vmatmul.mubr.f32.gmra.mrb[0].mxu0 %v879
      %v1059 = vpop.f32.mrb[0].mxu0
      %v1060 = vadd.f32 0.0, %v1059
      %v1061 = vpop.f32.mrb[0].mxu0
      %1062 = vmatprep.mubr.f32.mxu0 0.0
      %1063 = vmatmul.mubr.f32.gmra.mrb[0].mxu0 %v882
      %v1064 = vpop.f32.mrb[0].mxu0
      %v1065 = vadd.f32 0.0, %v1064
      %v1066 = vpop.f32.mrb[0].mxu0
      %1067 = vmatprep.mubr.f32.mxu0 0.0
      %1068 = vmatmul.mubr.f32.gmra.mrb[0].mxu0 %v885
      %v1069 = vpop.f32.mrb[0].mxu0
      %v1070 = vadd.f32 0.0, %v1069
      %v1071 = vpop.f32.mrb[0].mxu0
      %1072 = vmatprep.mubr.f32.mxu0 0.0
      %1073 = vmatmul.mubr.f32.gmra.mrb[0].mxu0 %v888
      %v1074 = vpop.f32.mrb[0].mxu0
      %v1075 = vadd.f32 0.0, %v1074
      %v1076 = vpop.f32.mrb[0].mxu0
      %1077 = vmatprep.mubr.f32.mxu0 0.0
      %1078 = vmatmul.mubr.f32.gmra.mrb[0].mxu0 %v891
      %v1079 = vpop.f32.mrb[0].mxu0
      %v1080 = vadd.f32 0.0, %v1079
      %v1081 = vpop.f32.mrb[0].mxu0
      %1082 = vdwg.mxu0
      %v1083 = vmax.f32 %v767, %v960
      %v1084 = vmax.f32 %v768, %v965
      %v1085 = vmax.f32 %v769, %v970
      %v1086 = vmax.f32 %v770, %v975
      %v1087 = vmax.f32 %v771, %v980
      %v1088 = vmax.f32 %v772, %v985
      %v1089 = vmax.f32 %v773, %v990
      %v1090 = vmax.f32 %v774, %v995
      %v1091 = vmax.f32 %v775, %v1000
      %v1092 = vmax.f32 %v776, %v1005
      %v1093 = vmax.f32 %v777, %v1010
      %v1094 = vmax.f32 %v778, %v1015
      %v1095 = vmax.f32 %v779, %v1020
      %v1096 = vmax.f32 %v780, %v1025
      %v1097 = vmax.f32 %v781, %v1030
      %v1098 = vmax.f32 %v782, %v1035
      %v1099 = vmax.f32 %v783, %v1040
      %v1100 = vmax.f32 %v784, %v1045
      %v1101 = vmax.f32 %v785, %v1050
      %v1102 = vmax.f32 %v786, %v1055
      %v1103 = vmax.f32 %v787, %v1060
      %v1104 = vmax.f32 %v788, %v1065
      %v1105 = vmax.f32 %v789, %v1070
      %v1106 = vmax.f32 %v790, %v1075
      %v1107 = vmax.f32 %v791, %v1080
      %s1108 = scalar_lea.vmem %s165, 600
      %v1109 = vld [vmem:[%s1108] sm:$0xff]
      %v1110 = vld [vmem:[%s1108 + $0x8] sm:$0xff]
      %v1111 = vld [vmem:[%s1108 + $0x10] sm:$0xff]
      %v1112 = vld [vmem:[%s1108 + $0x18] sm:$0xff]
      %v1113 = vld [vmem:[%s1108 + $0x20] sm:$0xff]
      %v1114 = vld [vmem:[%s1108 + $0x28] sm:$0xff]
      %v1115 = vld [vmem:[%s1108 + $0x30] sm:$0xff]
      %v1116 = vld [vmem:[%s1108 + $0x38] sm:$0xff]
      %v1117 = vld [vmem:[%s1108 + $0x40] sm:$0xff]
      %v1118 = vld [vmem:[%s1108 + $0x48] sm:$0xff]
      %v1119 = vld [vmem:[%s1108 + $0x50] sm:$0xff]
      %v1120 = vld [vmem:[%s1108 + $0x58] sm:$0xff]
      %v1121 = vld [vmem:[%s1108 + $0x60] sm:$0xff]
      %v1122 = vld [vmem:[%s1108 + $0x68] sm:$0xff]
      %v1123 = vld [vmem:[%s1108 + $0x70] sm:$0xff]
      %v1124 = vld [vmem:[%s1108 + $0x78] sm:$0xff]
      %v1125 = vld [vmem:[%s1108 + $0x80] sm:$0xff]
      %v1126 = vld [vmem:[%s1108 + $0x88] sm:$0xff]
      %v1127 = vld [vmem:[%s1108 + $0x90] sm:$0xff]
      %v1128 = vld [vmem:[%s1108 + $0x98] sm:$0xff]
      %v1129 = vld [vmem:[%s1108 + $0xa0] sm:$0xff]
      %v1130 = vld [vmem:[%s1108 + $0xa8] sm:$0xff]
      %v1131 = vld [vmem:[%s1108 + $0xb0] sm:$0xff]
      %v1132 = vld [vmem:[%s1108 + $0xb8] sm:$0xff]
      %v1133 = vld [vmem:[%s1108 + $0xc0] sm:$0xf]
      %v1135 = vsel %vm206, %v1109, 0
      %v1138 = vsel %vm206, %v1110, 0
      %v1141 = vsel %vm206, %v1111, 0
      %v1144 = vsel %vm206, %v1112, 0
      %v1147 = vsel %vm206, %v1113, 0
      %v1150 = vsel %vm206, %v1114, 0
      %v1153 = vsel %vm206, %v1115, 0
      %v1156 = vsel %vm206, %v1116, 0
      %v1159 = vsel %vm206, %v1117, 0
      %v1162 = vsel %vm206, %v1118, 0
      %v1165 = vsel %vm206, %v1119, 0
      %v1168 = vsel %vm206, %v1120, 0
      %v1171 = vsel %vm206, %v1121, 0
      %v1174 = vsel %vm206, %v1122, 0
      %v1177 = vsel %vm206, %v1123, 0
      %v1180 = vsel %vm206, %v1124, 0
      %v1183 = vsel %vm206, %v1125, 0
      %v1186 = vsel %vm206, %v1126, 0
      %v1189 = vsel %vm206, %v1127, 0
      %v1192 = vsel %vm206, %v1128, 0
      %v1195 = vsel %vm206, %v1129, 0
      %v1198 = vsel %vm206, %v1130, 0
      %v1201 = vsel %vm206, %v1131, 0
      %v1204 = vsel %vm206, %v1132, 0
      %v1207 = vsel %vm206, %v1133, 0
      %1209 = vmatprep.subr.mxu0 0.0
      %1210 = vmatpush1.msra.mxu0 %v171
      %1211 = vmatprep.subr.mxu0 0.0
      %1212 = vmatpush1.msra.mxu0 %v172
      %1213 = vmatprep.subr.mxu0 0.0
      %1214 = vmatpush1.msra.mxu0 %v173
      %1215 = vmatprep.subr.mxu0 0.0
      %1216 = vmatpush1.msra.mxu0 %v174
      %1217 = vmatprep.subr.mxu0 0.0
      %1218 = vmatpush1.msra.mxu0 %v175
      %1219 = vmatprep.subr.mxu0 0.0
      %1220 = vmatpush1.msra.mxu0 %v176
      %1221 = vmatprep.subr.mxu0 0.0
      %1222 = vmatpush1.msra.mxu0 %v177
      %1223 = vmatprep.subr.mxu0 0.0
      %1224 = vmatpush1.msra.mxu0 %v178
      %1225 = vmatprep.subr.mxu0 0.0
      %1226 = vmatpush1.msra.mxu0 %v179
      %1227 = vmatprep.subr.mxu0 0.0
      %1228 = vmatpush1.msra.mxu0 %v284
      %1229 = vmatprep.subr.mxu0 0.0
      %1230 = vmatpush1.msra.mxu0 0.0
      %1231 = vmatprep.subr.mxu0 0.0
      %1232 = vmatpush1.msra.mxu0 0.0
      %1233 = vmatprep.subr.mxu0 0.0
      %1234 = vmatpush1.msra.mxu0 0.0
      %1235 = vmatprep.subr.mxu0 0.0
      %1236 = vmatpush1.msra.mxu0 0.0
      %1237 = vmatprep.subr.mxu0 0.0
      %1238 = vmatpush1.msra.mxu0 0.0
      %1239 = vmatprep.subr.mxu0 0.0
      %1240 = vmatpush1.msra.mxu0 0.0
      %1241 = vmatprep.subr.mxu0 0.0
      %1242 = vmatpush1.msra.mxu0 0.0
      %1243 = vmatprep.subr.mxu0 0.0
      %1244 = vmatpush1.msra.mxu0 0.0
      %1245 = vmatprep.subr.mxu0 0.0
      %1246 = vmatpush1.msra.mxu0 0.0
      %1247 = vmatprep.subr.mxu0 0.0
      %1248 = vmatpush1.msra.mxu0 0.0
      %1249 = vmatprep.subr.mxu0 0.0
      %1250 = vmatpush1.msra.mxu0 0.0
      %1251 = vmatprep.subr.mxu0 0.0
      %1252 = vmatpush1.msra.mxu0 0.0
      %1253 = vmatprep.subr.mxu0 0.0
      %1254 = vmatpush1.msra.mxu0 0.0
      %1255 = vmatprep.subr.mxu0 0.0
      %1256 = vmatpush1.msra.mxu0 0.0
      %1257 = vmatprep.subr.mxu0 0.0
      %1258 = vmatpush1.msra.mxu0 0.0
      %1259 = vmatprep.subr.mxu0 0.0
      %1260 = vmatpush1.msra.mxu0 0.0
      %1261 = vmatprep.subr.mxu0 0.0
      %1262 = vmatpush1.msra.mxu0 0.0
      %1263 = vmatprep.subr.mxu0 0.0
      %1264 = vmatpush1.msra.mxu0 0.0
      %1265 = vmatprep.subr.mxu0 0.0
      %1266 = vmatpush1.msra.mxu0 0.0
      %1267 = vmatprep.subr.mxu0 0.0
      %1268 = vmatpush1.msra.mxu0 0.0
      %1269 = vmatprep.subr.mxu0 0.0
      %1270 = vmatpush1.msra.mxu0 0.0
      %1271 = vmatprep.subr.mxu0 0.0
      %1272 = vmatpush1.msra.mxu0 0.0
      %1273 = vmatprep.mubr.f32.mxu0 0.0
      %1274 = vmatmul.mubr.f32.gmra.mrb[0].mxu0 %v1135
      %v1275 = vpop.f32.mrb[0].mxu0
      %v1276 = vadd.f32 0.0, %v1275
      %v1277 = vpop.f32.mrb[0].mxu0
      %1278 = vmatprep.mubr.f32.mxu0 0.0
      %1279 = vmatmul.mubr.f32.gmra.mrb[0].mxu0 %v1138
      %v1280 = vpop.f32.mrb[0].mxu0
      %v1281 = vadd.f32 0.0, %v1280
      %v1282 = vpop.f32.mrb[0].mxu0
      %1283 = vmatprep.mubr.f32.mxu0 0.0
      %1284 = vmatmul.mubr.f32.gmra.mrb[0].mxu0 %v1141
      %v1285 = vpop.f32.mrb[0].mxu0
      %v1286 = vadd.f32 0.0, %v1285
      %v1287 = vpop.f32.mrb[0].mxu0
      %1288 = vmatprep.mubr.f32.mxu0 0.0
      %1289 = vmatmul.mubr.f32.gmra.mrb[0].mxu0 %v1144
      %v1290 = vpop.f32.mrb[0].mxu0
      %v1291 = vadd.f32 0.0, %v1290
      %v1292 = vpop.f32.mrb[0].mxu0
      %1293 = vmatprep.mubr.f32.mxu0 0.0
      %1294 = vmatmul.mubr.f32.gmra.mrb[0].mxu0 %v1147
      %v1295 = vpop.f32.mrb[0].mxu0
      %v1296 = vadd.f32 0.0, %v1295
      %v1297 = vpop.f32.mrb[0].mxu0
      %1298 = vmatprep.mubr.f32.mxu0 0.0
      %1299 = vmatmul.mubr.f32.gmra.mrb[0].mxu0 %v1150
      %v1300 = vpop.f32.mrb[0].mxu0
      %v1301 = vadd.f32 0.0, %v1300
      %v1302 = vpop.f32.mrb[0].mxu0
      %1303 = vmatprep.mubr.f32.mxu0 0.0
      %1304 = vmatmul.mubr.f32.gmra.mrb[0].mxu0 %v1153
      %v1305 = vpop.f32.mrb[0].mxu0
      %v1306 = vadd.f32 0.0, %v1305
      %v1307 = vpop.f32.mrb[0].mxu0
      %1308 = vmatprep.mubr.f32.mxu0 0.0
      %1309 = vmatmul.mubr.f32.gmra.mrb[0].mxu0 %v1156
      %v1310 = vpop.f32.mrb[0].mxu0
      %v1311 = vadd.f32 0.0, %v1310
      %v1312 = vpop.f32.mrb[0].mxu0
      %1313 = vmatprep.mubr.f32.mxu0 0.0
      %1314 = vmatmul.mubr.f32.gmra.mrb[0].mxu0 %v1159
      %v1315 = vpop.f32.mrb[0].mxu0
      %v1316 = vadd.f32 0.0, %v1315
      %v1317 = vpop.f32.mrb[0].mxu0
      %1318 = vmatprep.mubr.f32.mxu0 0.0
      %1319 = vmatmul.mubr.f32.gmra.mrb[0].mxu0 %v1162
      %v1320 = vpop.f32.mrb[0].mxu0
      %v1321 = vadd.f32 0.0, %v1320
      %v1322 = vpop.f32.mrb[0].mxu0
      %1323 = vmatprep.mubr.f32.mxu0 0.0
      %1324 = vmatmul.mubr.f32.gmra.mrb[0].mxu0 %v1165
      %v1325 = vpop.f32.mrb[0].mxu0
      %v1326 = vadd.f32 0.0, %v1325
      %v1327 = vpop.f32.mrb[0].mxu0
      %1328 = vmatprep.mubr.f32.mxu0 0.0
      %1329 = vmatmul.mubr.f32.gmra.mrb[0].mxu0 %v1168
      %v1330 = vpop.f32.mrb[0].mxu0
      %v1331 = vadd.f32 0.0, %v1330
      %v1332 = vpop.f32.mrb[0].mxu0
      %1333 = vmatprep.mubr.f32.mxu0 0.0
      %1334 = vmatmul.mubr.f32.gmra.mrb[0].mxu0 %v1171
      %v1335 = vpop.f32.mrb[0].mxu0
      %v1336 = vadd.f32 0.0, %v1335
      %v1337 = vpop.f32.mrb[0].mxu0
      %1338 = vmatprep.mubr.f32.mxu0 0.0
      %1339 = vmatmul.mubr.f32.gmra.mrb[0].mxu0 %v1174
      %v1340 = vpop.f32.mrb[0].mxu0
      %v1341 = vadd.f32 0.0, %v1340
      %v1342 = vpop.f32.mrb[0].mxu0
      %1343 = vmatprep.mubr.f32.mxu0 0.0
      %1344 = vmatmul.mubr.f32.gmra.mrb[0].mxu0 %v1177
      %v1345 = vpop.f32.mrb[0].mxu0
      %v1346 = vadd.f32 0.0, %v1345
      %v1347 = vpop.f32.mrb[0].mxu0
      %1348 = vmatprep.mubr.f32.mxu0 0.0
      %1349 = vmatmul.mubr.f32.gmra.mrb[0].mxu0 %v1180
      %v1350 = vpop.f32.mrb[0].mxu0
      %v1351 = vadd.f32 0.0, %v1350
      %v1352 = vpop.f32.mrb[0].mxu0
      %1353 = vmatprep.mubr.f32.mxu0 0.0
      %1354 = vmatmul.mubr.f32.gmra.mrb[0].mxu0 %v1183
      %v1355 = vpop.f32.mrb[0].mxu0
      %v1356 = vadd.f32 0.0, %v1355
      %v1357 = vpop.f32.mrb[0].mxu0
      %1358 = vmatprep.mubr.f32.mxu0 0.0
      %1359 = vmatmul.mubr.f32.gmra.mrb[0].mxu0 %v1186
      %v1360 = vpop.f32.mrb[0].mxu0
      %v1361 = vadd.f32 0.0, %v1360
      %v1362 = vpop.f32.mrb[0].mxu0
      %1363 = vmatprep.mubr.f32.mxu0 0.0
      %1364 = vmatmul.mubr.f32.gmra.mrb[0].mxu0 %v1189
      %v1365 = vpop.f32.mrb[0].mxu0
      %v1366 = vadd.f32 0.0, %v1365
      %v1367 = vpop.f32.mrb[0].mxu0
      %1368 = vmatprep.mubr.f32.mxu0 0.0
      %1369 = vmatmul.mubr.f32.gmra.mrb[0].mxu0 %v1192
      %v1370 = vpop.f32.mrb[0].mxu0
      %v1371 = vadd.f32 0.0, %v1370
      %v1372 = vpop.f32.mrb[0].mxu0
      %1373 = vmatprep.mubr.f32.mxu0 0.0
      %1374 = vmatmul.mubr.f32.gmra.mrb[0].mxu0 %v1195
      %v1375 = vpop.f32.mrb[0].mxu0
      %v1376 = vadd.f32 0.0, %v1375
      %v1377 = vpop.f32.mrb[0].mxu0
      %1378 = vmatprep.mubr.f32.mxu0 0.0
      %1379 = vmatmul.mubr.f32.gmra.mrb[0].mxu0 %v1198
      %v1380 = vpop.f32.mrb[0].mxu0
      %v1381 = vadd.f32 0.0, %v1380
      %v1382 = vpop.f32.mrb[0].mxu0
      %1383 = vmatprep.mubr.f32.mxu0 0.0
      %1384 = vmatmul.mubr.f32.gmra.mrb[0].mxu0 %v1201
      %v1385 = vpop.f32.mrb[0].mxu0
      %v1386 = vadd.f32 0.0, %v1385
      %v1387 = vpop.f32.mrb[0].mxu0
      %1388 = vmatprep.mubr.f32.mxu0 0.0
      %1389 = vmatmul.mubr.f32.gmra.mrb[0].mxu0 %v1204
      %v1390 = vpop.f32.mrb[0].mxu0
      %v1391 = vadd.f32 0.0, %v1390
      %v1392 = vpop.f32.mrb[0].mxu0
      %1393 = vmatprep.mubr.f32.mxu0 0.0
      %1394 = vmatmul.mubr.f32.gmra.mrb[0].mxu0 %v1207
      %v1395 = vpop.f32.mrb[0].mxu0
      %v1396 = vadd.f32 0.0, %v1395
      %v1397 = vpop.f32.mrb[0].mxu0
      %1398 = vdwg.mxu0
      %v1399 = vmax.f32 %v1083, %v1276
      %v1400 = vmax.f32 %v1084, %v1281
      %v1401 = vmax.f32 %v1085, %v1286
      %v1402 = vmax.f32 %v1086, %v1291
      %v1403 = vmax.f32 %v1087, %v1296
      %v1404 = vmax.f32 %v1088, %v1301
      %v1405 = vmax.f32 %v1089, %v1306
      %v1406 = vmax.f32 %v1090, %v1311
      %v1407 = vmax.f32 %v1091, %v1316
      %v1408 = vmax.f32 %v1092, %v1321
      %v1409 = vmax.f32 %v1093, %v1326
      %v1410 = vmax.f32 %v1094, %v1331
      %v1411 = vmax.f32 %v1095, %v1336
      %v1412 = vmax.f32 %v1096, %v1341
      %v1413 = vmax.f32 %v1097, %v1346
      %v1414 = vmax.f32 %v1098, %v1351
      %v1415 = vmax.f32 %v1099, %v1356
      %v1416 = vmax.f32 %v1100, %v1361
      %v1417 = vmax.f32 %v1101, %v1366
      %v1418 = vmax.f32 %v1102, %v1371
      %v1419 = vmax.f32 %v1103, %v1376
      %v1420 = vmax.f32 %v1104, %v1381
      %v1421 = vmax.f32 %v1105, %v1386
      %v1422 = vmax.f32 %v1106, %v1391
      %v1423 = vmax.f32 %v1107, %v1396
      %v1424 = vld [vmem:[%s2] sm:$0x1]
      %v1426 = vlaneseq
      %v1427 = vshrl.u32 %v1426, 7
      %v1428 = vsub.s32 0, %v1427
      %v1429 = vrot.slane %v1424, %v1428
      %v1431 = vadd.f32 %v1399, %v1429
      %v1432 = vadd.f32 %v1400, %v1429
      %v1433 = vadd.f32 %v1401, %v1429
      %v1434 = vadd.f32 %v1402, %v1429
      %v1435 = vadd.f32 %v1403, %v1429
      %v1436 = vadd.f32 %v1404, %v1429
      %v1437 = vadd.f32 %v1405, %v1429
      %v1438 = vadd.f32 %v1406, %v1429
      %v1439 = vadd.f32 %v1407, %v1429
      %v1440 = vadd.f32 %v1408, %v1429
      %v1441 = vadd.f32 %v1409, %v1429
      %v1442 = vadd.f32 %v1410, %v1429
      %v1443 = vadd.f32 %v1411, %v1429
      %v1444 = vadd.f32 %v1412, %v1429
      %v1445 = vadd.f32 %v1413, %v1429
      %v1446 = vadd.f32 %v1414, %v1429
      %v1447 = vadd.f32 %v1415, %v1429
      %v1448 = vadd.f32 %v1416, %v1429
      %v1449 = vadd.f32 %v1417, %v1429
      %v1450 = vadd.f32 %v1418, %v1429
      %v1451 = vadd.f32 %v1419, %v1429
      %v1452 = vadd.f32 %v1420, %v1429
      %v1453 = vadd.f32 %v1421, %v1429
      %v1454 = vadd.f32 %v1422, %v1429
      %v1455 = vadd.f32 %v1423, %v1429
      %v1456 = vmax.f32 %v1431, 0.0
      %v1457 = vmax.f32 %v1432, 0.0
      %v1458 = vmax.f32 %v1433, 0.0
      %v1459 = vmax.f32 %v1434, 0.0
      %v1460 = vmax.f32 %v1435, 0.0
      %v1461 = vmax.f32 %v1436, 0.0
      %v1462 = vmax.f32 %v1437, 0.0
      %v1463 = vmax.f32 %v1438, 0.0
      %v1464 = vmax.f32 %v1439, 0.0
      %v1465 = vmax.f32 %v1440, 0.0
      %v1466 = vmax.f32 %v1441, 0.0
      %v1467 = vmax.f32 %v1442, 0.0
      %v1468 = vmax.f32 %v1443, 0.0
      %v1469 = vmax.f32 %v1444, 0.0
      %v1470 = vmax.f32 %v1445, 0.0
      %v1471 = vmax.f32 %v1446, 0.0
      %v1472 = vmax.f32 %v1447, 0.0
      %v1473 = vmax.f32 %v1448, 0.0
      %v1474 = vmax.f32 %v1449, 0.0
      %v1475 = vmax.f32 %v1450, 0.0
      %v1476 = vmax.f32 %v1451, 0.0
      %v1477 = vmax.f32 %v1452, 0.0
      %v1478 = vmax.f32 %v1453, 0.0
      %v1479 = vmax.f32 %v1454, 0.0
      %v1480 = vmax.f32 %v1455, 0.0
      %vm1481 = vcmask 64512
      %1482 = vst.msk [vmem:[%s170] sm:$0xff] %vm1481, %v1456
      %1483 = vst.msk [vmem:[%s170 + $0x8] sm:$0xff] %vm1481, %v1457
      %1484 = vst.msk [vmem:[%s170 + $0x10] sm:$0xff] %vm1481, %v1458
      %1485 = vst.msk [vmem:[%s170 + $0x18] sm:$0xff] %vm1481, %v1459
      %1486 = vst.msk [vmem:[%s170 + $0x20] sm:$0xff] %vm1481, %v1460
      %1487 = vst.msk [vmem:[%s170 + $0x28] sm:$0xff] %vm1481, %v1461
      %1488 = vst.msk [vmem:[%s170 + $0x30] sm:$0xff] %vm1481, %v1462
      %1489 = vst.msk [vmem:[%s170 + $0x38] sm:$0xff] %vm1481, %v1463
      %1490 = vst.msk [vmem:[%s170 + $0x40] sm:$0xff] %vm1481, %v1464
      %1491 = vst.msk [vmem:[%s170 + $0x48] sm:$0xff] %vm1481, %v1465
      %1492 = vst.msk [vmem:[%s170 + $0x50] sm:$0xff] %vm1481, %v1466
      %1493 = vst.msk [vmem:[%s170 + $0x58] sm:$0xff] %vm1481, %v1467
      %1494 = vst.msk [vmem:[%s170 + $0x60] sm:$0xff] %vm1481, %v1468
      %1495 = vst.msk [vmem:[%s170 + $0x68] sm:$0xff] %vm1481, %v1469
      %1496 = vst.msk [vmem:[%s170 + $0x70] sm:$0xff] %vm1481, %v1470
      %1497 = vst.msk [vmem:[%s170 + $0x78] sm:$0xff] %vm1481, %v1471
      %1498 = vst.msk [vmem:[%s170 + $0x80] sm:$0xff] %vm1481, %v1472
      %1499 = vst.msk [vmem:[%s170 + $0x88] sm:$0xff] %vm1481, %v1473
      %1500 = vst.msk [vmem:[%s170 + $0x90] sm:$0xff] %vm1481, %v1474
      %1501 = vst.msk [vmem:[%s170 + $0x98] sm:$0xff] %vm1481, %v1475
      %1502 = vst.msk [vmem:[%s170 + $0xa0] sm:$0xff] %vm1481, %v1476
      %1503 = vst.msk [vmem:[%s170 + $0xa8] sm:$0xff] %vm1481, %v1477
      %1504 = vst.msk [vmem:[%s170 + $0xb0] sm:$0xff] %vm1481, %v1478
      %1505 = vst.msk [vmem:[%s170 + $0xb8] sm:$0xff] %vm1481, %v1479
      %vm1506 = vcmask 60416
      %1507 = vst.msk [vmem:[%s170 + $0xc0] sm:$0xf] %vm1506, %v1480
      %p1508 = scmp.lt.s32.totalorder %s14, 1
      %s1509 = scalar_select %p1508, %s14, 1
      %s1510 = smul.addr %s1509, 25
      %s1511 = smul.addr %s1510, 8
      %s1512 = scalar_lea.vmem %s3, %s1511
      // Predicated region
      $region33: #{net_forward.3} parent=31 // pred_check
        %p1513 = pneg %p100
      $region34: #{net_forward.3} parent=31 // pred_check_branch
        %1515 = sbr.rel (%p1513) target = $region36
      $region35: #{net_forward.3} parent=31 // pred_region
        _
      $region36: #{net_forward.3} parent=31 // pred_fallthru
        _
    $region32: #{net_forward.3} parent=5 // pred_fallthru
      _
    %p1516 = scmp.le.s32.totalorder 2, %s9
    // Predicated region
    $region37: #{net_forward.3} parent=5 // pred_check
      %p1517 = pneg %p1516
    $region38: #{net_forward.3} parent=5 // pred_check_branch
      %1519 = sbr.rel (%p1517) target = $region40
    $region39: #{net_forward.3} parent=5 // pred_region
      %s1520 = ssub.s32 %s9, 2
      // Predicated region
      $region41: #{net_forward.3} parent=39 // pred_check
        %p1521 = pneg %p106
      $region42: #{net_forward.3} parent=39 // pred_check_branch
        %1523 = sbr.rel (%p1521) target = $region44
      $region43: #{net_forward.3} parent=39 // pred_region
        %p1524 = scmp.lt.s32.totalorder %s15, 1
        %s1525 = scalar_select %p1524, %s15, 1
        %s1526 = smul.addr %s1525, 25
        %s1527 = smul.addr %s1526, 8
        %s1528 = scalar_lea.vmem %s3, %s1527
      $region44: #{net_forward.3} parent=39 // pred_fallthru
        _
    $region40: #{net_forward.3} parent=5 // pred_fallthru
      _
  $region6: #{net_forward.3} parent=0 // loop_footer
    %s13 = sadd.s32 1, %s9
  $region7: #{net_forward.3} parent=0 // loop_footer_branch
    %8 = sbr.rel target = $region3
  $region8: #{net_forward.3} parent=0 // loop_exit
    _

// kernel: net_forward.4
$region0: #{net_forward.4}
  #allocation0 [shape = 'u32[]', space=smem, size = 0x4, offset = 0x4, fixed_abs, tag = 'smem constant byte address 0x4 - core index']
  #allocation1 [shape = 'u32[144,128]{1,0:T(1,128)}', space=vmem, size = 0x12000, scoped, tag = 'internal scratch']
  %s0 = inlined_call_operand.vmem [shape: f32[2,4,25,150], index: 0, kind: input, shape index: {}]
  %s1 = inlined_call_operand.vmem [shape: f32[150,128], index: 1, kind: input, shape index: {}]
  %s2 = inlined_call_operand.vmem [shape: f32[1,128], index: 2, kind: input, shape index: {}]
  %s3 = inlined_call_operand.vmem [shape: f32[2,25,16], index: 3, kind: output, shape index: {}]
  %s4 = sld [smem:[#allocation0]]
  $region45: #{net_forward.4} parent=0
    _
  %s6 = ssub.s32 1, %s4
  %s7 = scalar_select 0, %s6, %s4
  loop: start=0, step=1, limit=4
  $region2: #{net_forward.4} parent=0 // loop_pre_header
    _
  $region3: #{net_forward.4} parent=0 // loop_header
    %s9 = sphi 0, %s13
    %p10 = scmp.ge.s32.totalorder %s9, 4
    %s19 = sphi 0, %s21
    %s22 = sphi 0, %s19
    %s23 = sphi 0, %s22
    %s39 = sphi 0, %s23
    %s43 = sphi 0, %s43
    %s45 = sphi 0, %s43
    %s46 = sphi 0, %s45
    %s60 = sphi 0, %s46
    %s64 = sphi 0, %s64
    %s66 = sphi 0, %s64
    %s67 = sphi 0, %s66
    %s81 = sphi 0, %s67
    %s87 = sphi 0, %s89
    %s90 = sphi 0, %s87
    %s91 = sphi 0, %s90
    %s107 = sphi 0, %s91
  $region4: #{net_forward.4} parent=0 // loop_header_branch
    %12 = sbr.rel (%p10) target = $region8
  $region5: #{net_forward.4} parent=0 // loop_body
    %s14 = ssub.s32 %s9, 1
    %s15 = ssub.s32 %s9, 2
    %s16 = sadd.s32 %s9, 1
    %s17 = ssub.s32 %s9, %s16
    %p18 = scmp.eq.s32.totalorder %s17, 0
    %s20 = sadd.s32 %s19, 1
    %s21 = scalar_select %p18, %s19, %s20
    %p24 = pneg %p18
    %p25 = scmp.eq.s32.totalorder %s9, 1
    %p26 = por %p24, %p25
    %p27 = scmp.ne.s32.totalorder %s19, %s22
    %p28 = scmp.eq.s32.totalorder %s9, 0
    %p29 = por %p27, %p28
    %p30 = scmp.ne.s32.totalorder %s19, %s22
    %p31 = scmp.eq.s32.totalorder %s14, 1
    %p32 = por %p30, %p31
    %p33 = scmp.ne.s32.totalorder %s22, %s23
    %p34 = scmp.eq.s32.totalorder %s14, 0
    %p35 = por %p33, %p34
    %p36 = scmp.ne.s32.totalorder %s22, %s23
    %p37 = scmp.eq.s32.totalorder %s15, 1
    %p38 = por %p36, %p37
    %p40 = scmp.ne.s32.totalorder %s23, %s39
    %p41 = scmp.eq.s32.totalorder %s15, 0
    %p42 = por %p40, %p41
    %s44 = sadd.s32 %s43, 1
    %p47 = scmp.eq.s32.totalorder %s9, 1
    %p48 = scmp.ne.s32.totalorder %s43, %s45
    %p49 = scmp.eq.s32.totalorder %s9, 0
    %p50 = por %p48, %p49
    %p51 = scmp.ne.s32.totalorder %s43, %s45
    %p52 = scmp.eq.s32.totalorder %s14, 1
    %p53 = por %p51, %p52
    %p54 = scmp.ne.s32.totalorder %s45, %s46
    %p55 = scmp.eq.s32.totalorder %s14, 0
    %p56 = por %p54, %p55
    %p57 = scmp.ne.s32.totalorder %s45, %s46
    %p58 = scmp.eq.s32.totalorder %s15, 1
    %p59 = por %p57, %p58
    %p61 = scmp.ne.s32.totalorder %s46, %s60
    %p62 = scmp.eq.s32.totalorder %s15, 0
    %p63 = por %p61, %p62
    %s65 = sadd.s32 %s64, 1
    %p68 = scmp.eq.s32.totalorder %s9, 1
    %p69 = scmp.ne.s32.totalorder %s64, %s66
    %p70 = scmp.eq.s32.totalorder %s9, 0
    %p71 = por %p69, %p70
    %p72 = scmp.ne.s32.totalorder %s64, %s66
    %p73 = scmp.eq.s32.totalorder %s14, 1
    %p74 = por %p72, %p73
    %p75 = scmp.ne.s32.totalorder %s66, %s67
    %p76 = scmp.eq.s32.totalorder %s14, 0
    %p77 = por %p75, %p76
    %p78 = scmp.ne.s32.totalorder %s66, %s67
    %p79 = scmp.eq.s32.totalorder %s15, 1
    %p80 = por %p78, %p79
    %p82 = scmp.ne.s32.totalorder %s67, %s81
    %p83 = scmp.eq.s32.totalorder %s15, 0
    %p84 = por %p82, %p83
    %s85 = ssub.s32 %s9, %s16
    %p86 = scmp.eq.s32.totalorder %s85, 0
    %s88 = sadd.s32 %s87, 1
    %s89 = scalar_select %p86, %s87, %s88
    %p92 = pneg %p86
    %p93 = scmp.eq.s32.totalorder %s9, 1
    %p94 = por %p92, %p93
    %p95 = scmp.ne.s32.totalorder %s87, %s90
    %p96 = scmp.eq.s32.totalorder %s9, 0
    %p97 = por %p95, %p96
    %p98 = scmp.ne.s32.totalorder %s87, %s90
    %p99 = scmp.eq.s32.totalorder %s14, 1
    %p100 = por %p98, %p99
    %p101 = scmp.ne.s32.totalorder %s90, %s91
    %p102 = scmp.eq.s32.totalorder %s14, 0
    %p103 = por %p101, %p102
    %p104 = scmp.ne.s32.totalorder %s90, %s91
    %p105 = scmp.eq.s32.totalorder %s15, 1
    %p106 = por %p104, %p105
    %p108 = scmp.ne.s32.totalorder %s91, %s107
    %p109 = scmp.eq.s32.totalorder %s15, 0
    %p110 = por %p108, %p109
    %p111 = scmp.le.s32.totalorder 1, %s9
    %p112 = scmp.lt.s32.totalorder %s9, 3
    %p113 = pnand %p111, %p112
    %p114 = pneg %p113
    // Predicated region
    $region9: #{net_forward.4} parent=5 // pred_check
      _
    $region10: #{net_forward.4} parent=5 // pred_check_branch
      %116 = sbr.rel (%p113) target = $region12
    $region11: #{net_forward.4} parent=5 // pred_region
      %s117 = ssub.s32 %s9, 1
      // Predicated region
      $region13: #{net_forward.4} parent=11 // pred_check
        %p118 = pneg %p56
      $region14: #{net_forward.4} parent=11 // pred_check_branch
        %120 = sbr.rel (%p118) target = $region16
      $region15: #{net_forward.4} parent=11 // pred_region
        _
      $region16: #{net_forward.4} parent=11 // pred_fallthru
        _
      // Predicated region
      $region17: #{net_forward.4} parent=11 // pred_check
        %p121 = pneg %p77
      $region18: #{net_forward.4} parent=11 // pred_check_branch
        %123 = sbr.rel (%p121) target = $region20
      $region19: #{net_forward.4} parent=11 // pred_region
        _
      $region20: #{net_forward.4} parent=11 // pred_fallthru
        _
    $region12: #{net_forward.4} parent=5 // pred_fallthru
      _
    %p124 = scmp.lt.s32.totalorder %s9, 2
    // Predicated region
    $region21: #{net_forward.4} parent=5 // pred_check
      %p125 = pneg %p124
    $region22: #{net_forward.4} parent=5 // pred_check_branch
      %127 = sbr.rel (%p125) target = $region24
    $region23: #{net_forward.4} parent=5 // pred_region
      // Predicated region
      $region25: #{net_forward.4} parent=23 // pred_check
        %p128 = pneg %p29
      $region26: #{net_forward.4} parent=23 // pred_check_branch
        %130 = sbr.rel (%p128) target = $region28
      $region27: #{net_forward.4} parent=23 // pred_region
        %p131 = scmp.lt.s32.totalorder %s9, 1
        %s132 = scalar_select %p131, %s9, 1
        %s133 = smul.addr %s132, 32
        %s134 = smul.addr %s133, 8
        %s135 = scalar_lea.vmem %s0, %s134
      $region28: #{net_forward.4} parent=23 // pred_fallthru
        _
    $region24: #{net_forward.4} parent=5 // pred_fallthru
      _
    %p136 = scmp.le.s32.totalorder 1, %s9
    %p137 = scmp.lt.s32.totalorder %s9, 3
    %p138 = pnand %p136, %p137
    %p139 = pneg %p138
    // Predicated region
    $region29: #{net_forward.4} parent=5 // pred_check
      _
    $region30: #{net_forward.4} parent=5 // pred_check_branch
      %141 = sbr.rel (%p138) target = $region32
    $region31: #{net_forward.4} parent=5 // pred_region
      %s142 = ssub.s32 %s9, 1
      %p143 = scmp.lt.s32.totalorder %s14, 1
      %s144 = scalar_select %p143, %s14, 1
      %s145 = smul.addr %s144, 32
      %s146 = smul.addr %s145, 8
      %s147 = scalar_lea.vmem %s0, %s146
      %p148 = pneg %p35
      %p149 = pneg %p32
      %p150 = pneg %p56
      %p151 = pneg %p53
      %p152 = pneg %p77
      %p153 = pneg %p74
      %p154 = pneg %p103
      %p155 = pneg %p100
      %p156 = scmp.lt.s32.totalorder %s14, 1
      %s157 = scalar_select %p156, %s14, 1
      %s158 = smul.addr %s157, 4
      %s159 = smul.addr %s158, 8
      %s160 = scalar_lea.vmem %s3, %s159
      %p161 = scmp.lt.s32.totalorder %s14, 1
      %s162 = scalar_select %p161, %s14, 1
      %s163 = smul.addr %s162, 32
      %s164 = smul.addr %s163, 8
      %s165 = scalar_lea.vmem %s0, %s164
      %p166 = scmp.lt.s32.totalorder %s14, 1
      %s167 = scalar_select %p166, %s14, 1
      %s168 = smul.addr %s167, 4
      %s169 = smul.addr %s168, 8
      %s170 = scalar_lea.vmem %s3, %s169
      %v171 = vld [vmem:[%s1] sm:$0xff]
      %v172 = vld [vmem:[%s1 + $0x8] sm:$0xff]
      %v173 = vld [vmem:[%s1 + $0x10] sm:$0xff]
      %v174 = vld [vmem:[%s1 + $0x18] sm:$0xff]
      %v175 = vld [vmem:[%s1 + $0x20] sm:$0xff]
      %v176 = vld [vmem:[%s1 + $0x28] sm:$0xff]
      %v177 = vld [vmem:[%s1 + $0x30] sm:$0xff]
      %v178 = vld [vmem:[%s1 + $0x38] sm:$0xff]
      %v179 = vld [vmem:[%s1 + $0x40] sm:$0xff]
      %v180 = vld [vmem:[%s1 + $0x48] sm:$0xff]
      %v181 = vld [vmem:[%s1 + $0x50] sm:$0xff]
      %v182 = vld [vmem:[%s1 + $0x58] sm:$0xff]
      %v183 = vld [vmem:[%s1 + $0x60] sm:$0xff]
      %v184 = vld [vmem:[%s1 + $0x68] sm:$0xff]
      %v185 = vld [vmem:[%s1 + $0x70] sm:$0xff]
      %v186 = vld [vmem:[%s1 + $0x78] sm:$0xff]
      %v187 = vld [vmem:[%s1 + $0x80] sm:$0xff]
      %v188 = vld [vmem:[%s1 + $0x88] sm:$0xff]
      %v189 = vld [vmem:[%s1 + $0x90] sm:$0x3f]
      %v190 = vld [vmem:[%s165] sm:$0xff]
      %v191 = vld [vmem:[%s165 + $0x8] sm:$0xff]
      %v192 = vld [vmem:[%s165 + $0x10] sm:$0xff]
      %v193 = vld [vmem:[%s165 + $0x18] sm:$0xff]
      %v194 = vld [vmem:[%s165 + $0x20] sm:$0xff]
      %v195 = vld [vmem:[%s165 + $0x28] sm:$0xff]
      %v196 = vld [vmem:[%s165 + $0x30] sm:$0x1]
      %v197 = vld [vmem:[%s165 + $0x38] sm:$0x1]
      %vm198 = vcmask 179200
      %v200 = vsel %vm198, %v191, 0
      %v203 = vsel %vm198, %v193, 0
      %v206 = vsel %vm198, %v195, 0
      %v209 = vsel %vm198, %v197, 0
      %vm211 = vcmask 1045504
      %v213 = vsel %vm211, %v189, 0
      %215 = vmatprep.subr.mxu0 0.0
      %216 = vmatpush1.msra.mxu0 %v171
      %217 = vmatprep.subr.mxu0 0.0
      %218 = vmatpush1.msra.mxu0 %v172
      %219 = vmatprep.subr.mxu0 0.0
      %220 = vmatpush1.msra.mxu0 %v173
      %221 = vmatprep.subr.mxu0 0.0
      %222 = vmatpush1.msra.mxu0 %v174
      %223 = vmatprep.subr.mxu0 0.0
      %224 = vmatpush1.msra.mxu0 %v175
      %225 = vmatprep.subr.mxu0 0.0
      %226 = vmatpush1.msra.mxu0 %v176
      %227 = vmatprep.subr.mxu0 0.0
      %228 = vmatpush1.msra.mxu0 %v177
      %229 = vmatprep.subr.mxu0 0.0
      %230 = vmatpush1.msra.mxu0 %v178
      %231 = vmatprep.subr.mxu0 0.0
      %232 = vmatpush1.msra.mxu0 %v179
      %233 = vmatprep.subr.mxu0 0.0
      %234 = vmatpush1.msra.mxu0 %v180
      %235 = vmatprep.subr.mxu0 0.0
      %236 = vmatpush1.msra.mxu0 %v181
      %237 = vmatprep.subr.mxu0 0.0
      %238 = vmatpush1.msra.mxu0 %v182
      %239 = vmatprep.subr.mxu0 0.0
      %240 = vmatpush1.msra.mxu0 %v183
      %241 = vmatprep.subr.mxu0 0.0
      %242 = vmatpush1.msra.mxu0 %v184
      %243 = vmatprep.subr.mxu0 0.0
      %244 = vmatpush1.msra.mxu0 %v185
      %245 = vmatprep.subr.mxu0 0.0
      %246 = vmatpush1.msra.mxu0 %v186
      %247 = vmatprep.subr.mxu0 0.0
      %248 = vmatpush1.msra.mxu0 %v187
      %249 = vmatprep.subr.mxu0 0.0
      %250 = vmatpush1.msra.mxu0 %v188
      %251 = vmatprep.subr.mxu0 0.0
      %252 = vmatpush1.msra.mxu0 %v213
      %253 = vmatprep.subr.mxu0 0.0
      %254 = vmatpush1.msra.mxu0 0.0
      %255 = vmatprep.subr.mxu0 0.0
      %256 = vmatpush1.msra.mxu0 0.0
      %257 = vmatprep.subr.mxu0 0.0
      %258 = vmatpush1.msra.mxu0 0.0
      %259 = vmatprep.subr.mxu0 0.0
      %260 = vmatpush1.msra.mxu0 0.0
      %261 = vmatprep.subr.mxu0 0.0
      %262 = vmatpush1.msra.mxu0 0.0
      %263 = vmatprep.subr.mxu0 0.0
      %264 = vmatpush1.msra.mxu0 0.0
      %265 = vmatprep.subr.mxu0 0.0
      %266 = vmatpush1.msra.mxu0 0.0
      %267 = vmatprep.subr.mxu0 0.0
      %268 = vmatpush1.msra.mxu0 0.0
      %269 = vmatprep.subr.mxu0 0.0
      %270 = vmatpush1.msra.mxu0 0.0
      %271 = vmatprep.subr.mxu0 0.0
      %272 = vmatpush1.msra.mxu0 0.0
      %273 = vmatprep.subr.mxu0 0.0
      %274 = vmatpush1.msra.mxu0 0.0
      %275 = vmatprep.subr.mxu0 0.0
      %276 = vmatpush1.msra.mxu0 0.0
      %277 = vmatprep.subr.mxu0 0.0
      %278 = vmatpush1.msra.mxu0 0.0
      %279 = vmatprep.mubr.f32.mxu0 %v200
      %280 = vmatmul.mubr.f32.gmra.mrb[0].mxu0 %v190
      %v281 = vpop.f32.mrb[0].mxu0
      %v282 = vadd.f32 0.0, %v281
      %v283 = vpop.f32.mrb[0].mxu0
      %284 = vmatprep.mubr.f32.mxu0 %v203
      %285 = vmatmul.mubr.f32.gmra.mrb[0].mxu0 %v192
      %v286 = vpop.f32.mrb[0].mxu0
      %v287 = vadd.f32 0.0, %v286
      %v288 = vpop.f32.mrb[0].mxu0
      %289 = vmatprep.mubr.f32.mxu0 %v206
      %290 = vmatmul.mubr.f32.gmra.mrb[0].mxu0 %v194
      %v291 = vpop.f32.mrb[0].mxu0
      %v292 = vadd.f32 0.0, %v291
      %v293 = vpop.f32.mrb[0].mxu0
      %294 = vmatprep.mubr.f32.mxu0 %v209
      %295 = vmatmul.mubr.f32.gmra.mrb[0].mxu0 %v196
      %v296 = vpop.f32.mrb[0].mxu0
      %v297 = vadd.f32 0.0, %v296
      %v298 = vpop.f32.mrb[0].mxu0
      %299 = vdwg.mxu0
      %s300 = scalar_lea.vmem %s165, 64
      %v301 = vld [vmem:[%s300] sm:$0xff]
      %v302 = vld [vmem:[%s300 + $0x8] sm:$0xff]
      %v303 = vld [vmem:[%s300 + $0x10] sm:$0xff]
      %v304 = vld [vmem:[%s300 + $0x18] sm:$0xff]
      %v305 = vld [vmem:[%s300 + $0x20] sm:$0xff]
      %v306 = vld [vmem:[%s300 + $0x28] sm:$0xff]
      %v307 = vld [vmem:[%s300 + $0x30] sm:$0x1]
      %v308 = vld [vmem:[%s300 + $0x38] sm:$0x1]
      %v310 = vsel %vm198, %v302, 0
      %v313 = vsel %vm198, %v304, 0
      %v316 = vsel %vm198, %v306, 0
      %v319 = vsel %vm198, %v308, 0
      %321 = vmatprep.subr.mxu0 0.0
      %322 = vmatpush1.msra.mxu0 %v171
      %323 = vmatprep.subr.mxu0 0.0
      %324 = vmatpush1.msra.mxu0 %v172
      %325 = vmatprep.subr.mxu0 0.0
      %326 = vmatpush1.msra.mxu0 %v173
      %327 = vmatprep.subr.mxu0 0.0
      %328 = vmatpush1.msra.mxu0 %v174
      %329 = vmatprep.subr.mxu0 0.0
      %330 = vmatpush1.msra.mxu0 %v175
      %331 = vmatprep.subr.mxu0 0.0
      %332 = vmatpush1.msra.mxu0 %v176
      %333 = vmatprep.subr.mxu0 0.0
      %334 = vmatpush1.msra.mxu0 %v177
      %335 = vmatprep.subr.mxu0 0.0
      %336 = vmatpush1.msra.mxu0 %v178
      %337 = vmatprep.subr.mxu0 0.0
      %338 = vmatpush1.msra.mxu0 %v179
      %339 = vmatprep.subr.mxu0 0.0
      %340 = vmatpush1.msra.mxu0 %v180
      %341 = vmatprep.subr.mxu0 0.0
      %342 = vmatpush1.msra.mxu0 %v181
      %343 = vmatprep.subr.mxu0 0.0
      %344 = vmatpush1.msra.mxu0 %v182
      %345 = vmatprep.subr.mxu0 0.0
      %346 = vmatpush1.msra.mxu0 %v183
      %347 = vmatprep.subr.mxu0 0.0
      %348 = vmatpush1.msra.mxu0 %v184
      %349 = vmatprep.subr.mxu0 0.0
      %350 = vmatpush1.msra.mxu0 %v185
      %351 = vmatprep.subr.mxu0 0.0
      %352 = vmatpush1.msra.mxu0 %v186
      %353 = vmatprep.subr.mxu0 0.0
      %354 = vmatpush1.msra.mxu0 %v187
      %355 = vmatprep.subr.mxu0 0.0
      %356 = vmatpush1.msra.mxu0 %v188
      %357 = vmatprep.subr.mxu0 0.0
      %358 = vmatpush1.msra.mxu0 %v213
      %359 = vmatprep.subr.mxu0 0.0
      %360 = vmatpush1.msra.mxu0 0.0
      %361 = vmatprep.subr.mxu0 0.0
      %362 = vmatpush1.msra.mxu0 0.0
      %363 = vmatprep.subr.mxu0 0.0
      %364 = vmatpush1.msra.mxu0 0.0
      %365 = vmatprep.subr.mxu0 0.0
      %366 = vmatpush1.msra.mxu0 0.0
      %367 = vmatprep.subr.mxu0 0.0
      %368 = vmatpush1.msra.mxu0 0.0
      %369 = vmatprep.subr.mxu0 0.0
      %370 = vmatpush1.msra.mxu0 0.0
      %371 = vmatprep.subr.mxu0 0.0
      %372 = vmatpush1.msra.mxu0 0.0
      %373 = vmatprep.subr.mxu0 0.0
      %374 = vmatpush1.msra.mxu0 0.0
      %375 = vmatprep.subr.mxu0 0.0
      %376 = vmatpush1.msra.mxu0 0.0
      %377 = vmatprep.subr.mxu0 0.0
      %378 = vmatpush1.msra.mxu0 0.0
      %379 = vmatprep.subr.mxu0 0.0
      %380 = vmatpush1.msra.mxu0 0.0
      %381 = vmatprep.subr.mxu0 0.0
      %382 = vmatpush1.msra.mxu0 0.0
      %383 = vmatprep.subr.mxu0 0.0
      %384 = vmatpush1.msra.mxu0 0.0
      %385 = vmatprep.mubr.f32.mxu0 %v310
      %386 = vmatmul.mubr.f32.gmra.mrb[0].mxu0 %v301
      %v387 = vpop.f32.mrb[0].mxu0
      %v388 = vadd.f32 0.0, %v387
      %v389 = vpop.f32.mrb[0].mxu0
      %390 = vmatprep.mubr.f32.mxu0 %v313
      %391 = vmatmul.mubr.f32.gmra.mrb[0].mxu0 %v303
      %v392 = vpop.f32.mrb[0].mxu0
      %v393 = vadd.f32 0.0, %v392
      %v394 = vpop.f32.mrb[0].mxu0
      %395 = vmatprep.mubr.f32.mxu0 %v316
      %396 = vmatmul.mubr.f32.gmra.mrb[0].mxu0 %v305
      %v397 = vpop.f32.mrb[0].mxu0
      %v398 = vadd.f32 0.0, %v397
      %v399 = vpop.f32.mrb[0].mxu0
      %400 = vmatprep.mubr.f32.mxu0 %v319
      %401 = vmatmul.mubr.f32.gmra.mrb[0].mxu0 %v307
      %v402 = vpop.f32.mrb[0].mxu0
      %v403 = vadd.f32 0.0, %v402
      %v404 = vpop.f32.mrb[0].mxu0
      %405 = vdwg.mxu0
      %v406 = vmax.f32 %v282, %v388
      %v407 = vmax.f32 %v287, %v393
      %v408 = vmax.f32 %v292, %v398
      %v409 = vmax.f32 %v297, %v403
      %s410 = scalar_lea.vmem %s165, 128
      %v411 = vld [vmem:[%s410] sm:$0xff]
      %v412 = vld [vmem:[%s410 + $0x8] sm:$0xff]
      %v413 = vld [vmem:[%s410 + $0x10] sm:$0xff]
      %v414 = vld [vmem:[%s410 + $0x18] sm:$0xff]
      %v415 = vld [vmem:[%s410 + $0x20] sm:$0xff]
      %v416 = vld [vmem:[%s410 + $0x28] sm:$0xff]
      %v417 = vld [vmem:[%s410 + $0x30] sm:$0x1]
      %v418 = vld [vmem:[%s410 + $0x38] sm:$0x1]
      %v420 = vsel %vm198, %v412, 0
      %v423 = vsel %vm198, %v414, 0
      %v426 = vsel %vm198, %v416, 0
      %v429 = vsel %vm198, %v418, 0
      %431 = vmatprep.subr.mxu0 0.0
      %432 = vmatpush1.msra.mxu0 %v171
      %433 = vmatprep.subr.mxu0 0.0
      %434 = vmatpush1.msra.mxu0 %v172
      %435 = vmatprep.subr.mxu0 0.0
      %436 = vmatpush1.msra.mxu0 %v173
      %437 = vmatprep.subr.mxu0 0.0
      %438 = vmatpush1.msra.mxu0 %v174
      %439 = vmatprep.subr.mxu0 0.0
      %440 = vmatpush1.msra.mxu0 %v175
      %441 = vmatprep.subr.mxu0 0.0
      %442 = vmatpush1.msra.mxu0 %v176
      %443 = vmatprep.subr.mxu0 0.0
      %444 = vmatpush1.msra.mxu0 %v177
      %445 = vmatprep.subr.mxu0 0.0
      %446 = vmatpush1.msra.mxu0 %v178
      %447 = vmatprep.subr.mxu0 0.0
      %448 = vmatpush1.msra.mxu0 %v179
      %449 = vmatprep.subr.mxu0 0.0
      %450 = vmatpush1.msra.mxu0 %v180
      %451 = vmatprep.subr.mxu0 0.0
      %452 = vmatpush1.msra.mxu0 %v181
      %453 = vmatprep.subr.mxu0 0.0
      %454 = vmatpush1.msra.mxu0 %v182
      %455 = vmatprep.subr.mxu0 0.0
      %456 = vmatpush1.msra.mxu0 %v183
      %457 = vmatprep.subr.mxu0 0.0
      %458 = vmatpush1.msra.mxu0 %v184
      %459 = vmatprep.subr.mxu0 0.0
      %460 = vmatpush1.msra.mxu0 %v185
      %461 = vmatprep.subr.mxu0 0.0
      %462 = vmatpush1.msra.mxu0 %v186
      %463 = vmatprep.subr.mxu0 0.0
      %464 = vmatpush1.msra.mxu0 %v187
      %465 = vmatprep.subr.mxu0 0.0
      %466 = vmatpush1.msra.mxu0 %v188
      %467 = vmatprep.subr.mxu0 0.0
      %468 = vmatpush1.msra.mxu0 %v213
      %469 = vmatprep.subr.mxu0 0.0
      %470 = vmatpush1.msra.mxu0 0.0
      %471 = vmatprep.subr.mxu0 0.0
      %472 = vmatpush1.msra.mxu0 0.0
      %473 = vmatprep.subr.mxu0 0.0
      %474 = vmatpush1.msra.mxu0 0.0
      %475 = vmatprep.subr.mxu0 0.0
      %476 = vmatpush1.msra.mxu0 0.0
      %477 = vmatprep.subr.mxu0 0.0
      %478 = vmatpush1.msra.mxu0 0.0
      %479 = vmatprep.subr.mxu0 0.0
      %480 = vmatpush1.msra.mxu0 0.0
      %481 = vmatprep.subr.mxu0 0.0
      %482 = vmatpush1.msra.mxu0 0.0
      %483 = vmatprep.subr.mxu0 0.0
      %484 = vmatpush1.msra.mxu0 0.0
      %485 = vmatprep.subr.mxu0 0.0
      %486 = vmatpush1.msra.mxu0 0.0
      %487 = vmatprep.subr.mxu0 0.0
      %488 = vmatpush1.msra.mxu0 0.0
      %489 = vmatprep.subr.mxu0 0.0
      %490 = vmatpush1.msra.mxu0 0.0
      %491 = vmatprep.subr.mxu0 0.0
      %492 = vmatpush1.msra.mxu0 0.0
      %493 = vmatprep.subr.mxu0 0.0
      %494 = vmatpush1.msra.mxu0 0.0
      %495 = vmatprep.mubr.f32.mxu0 %v420
      %496 = vmatmul.mubr.f32.gmra.mrb[0].mxu0 %v411
      %v497 = vpop.f32.mrb[0].mxu0
      %v498 = vadd.f32 0.0, %v497
      %v499 = vpop.f32.mrb[0].mxu0
      %500 = vmatprep.mubr.f32.mxu0 %v423
      %501 = vmatmul.mubr.f32.gmra.mrb[0].mxu0 %v413
      %v502 = vpop.f32.mrb[0].mxu0
      %v503 = vadd.f32 0.0, %v502
      %v504 = vpop.f32.mrb[0].mxu0
      %505 = vmatprep.mubr.f32.mxu0 %v426
      %506 = vmatmul.mubr.f32.gmra.mrb[0].mxu0 %v415
      %v507 = vpop.f32.mrb[0].mxu0
      %v508 = vadd.f32 0.0, %v507
      %v509 = vpop.f32.mrb[0].mxu0
      %510 = vmatprep.mubr.f32.mxu0 %v429
      %511 = vmatmul.mubr.f32.gmra.mrb[0].mxu0 %v417
      %v512 = vpop.f32.mrb[0].mxu0
      %v513 = vadd.f32 0.0, %v512
      %v514 = vpop.f32.mrb[0].mxu0
      %515 = vdwg.mxu0
      %v516 = vmax.f32 %v406, %v498
      %v517 = vmax.f32 %v407, %v503
      %v518 = vmax.f32 %v408, %v508
      %v519 = vmax.f32 %v409, %v513
      %s520 = scalar_lea.vmem %s165, 192
      %v521 = vld [vmem:[%s520] sm:$0xff]
      %v522 = vld [vmem:[%s520 + $0x8] sm:$0xff]
      %v523 = vld [vmem:[%s520 + $0x10] sm:$0xff]
      %v524 = vld [vmem:[%s520 + $0x18] sm:$0xff]
      %v525 = vld [vmem:[%s520 + $0x20] sm:$0xff]
      %v526 = vld [vmem:[%s520 + $0x28] sm:$0xff]
      %v527 = vld [vmem:[%s520 + $0x30] sm:$0x1]
      %v528 = vld [vmem:[%s520 + $0x38] sm:$0x1]
      %v530 = vsel %vm198, %v522, 0
      %v533 = vsel %vm198, %v524, 0
      %v536 = vsel %vm198, %v526, 0
      %v539 = vsel %vm198, %v528, 0
      %541 = vmatprep.subr.mxu0 0.0
      %542 = vmatpush1.msra.mxu0 %v171
      %543 = vmatprep.subr.mxu0 0.0
      %544 = vmatpush1.msra.mxu0 %v172
      %545 = vmatprep.subr.mxu0 0.0
      %546 = vmatpush1.msra.mxu0 %v173
      %547 = vmatprep.subr.mxu0 0.0
      %548 = vmatpush1.msra.mxu0 %v174
      %549 = vmatprep.subr.mxu0 0.0
      %550 = vmatpush1.msra.mxu0 %v175
      %551 = vmatprep.subr.mxu0 0.0
      %552 = vmatpush1.msra.mxu0 %v176
      %553 = vmatprep.subr.mxu0 0.0
      %554 = vmatpush1.msra.mxu0 %v177
      %555 = vmatprep.subr.mxu0 0.0
      %556 = vmatpush1.msra.mxu0 %v178
      %557 = vmatprep.subr.mxu0 0.0
      %558 = vmatpush1.msra.mxu0 %v179
      %559 = vmatprep.subr.mxu0 0.0
      %560 = vmatpush1.msra.mxu0 %v180
      %561 = vmatprep.subr.mxu0 0.0
      %562 = vmatpush1.msra.mxu0 %v181
      %563 = vmatprep.subr.mxu0 0.0
      %564 = vmatpush1.msra.mxu0 %v182
      %565 = vmatprep.subr.mxu0 0.0
      %566 = vmatpush1.msra.mxu0 %v183
      %567 = vmatprep.subr.mxu0 0.0
      %568 = vmatpush1.msra.mxu0 %v184
      %569 = vmatprep.subr.mxu0 0.0
      %570 = vmatpush1.msra.mxu0 %v185
      %571 = vmatprep.subr.mxu0 0.0
      %572 = vmatpush1.msra.mxu0 %v186
      %573 = vmatprep.subr.mxu0 0.0
      %574 = vmatpush1.msra.mxu0 %v187
      %575 = vmatprep.subr.mxu0 0.0
      %576 = vmatpush1.msra.mxu0 %v188
      %577 = vmatprep.subr.mxu0 0.0
      %578 = vmatpush1.msra.mxu0 %v213
      %579 = vmatprep.subr.mxu0 0.0
      %580 = vmatpush1.msra.mxu0 0.0
      %581 = vmatprep.subr.mxu0 0.0
      %582 = vmatpush1.msra.mxu0 0.0
      %583 = vmatprep.subr.mxu0 0.0
      %584 = vmatpush1.msra.mxu0 0.0
      %585 = vmatprep.subr.mxu0 0.0
      %586 = vmatpush1.msra.mxu0 0.0
      %587 = vmatprep.subr.mxu0 0.0
      %588 = vmatpush1.msra.mxu0 0.0
      %589 = vmatprep.subr.mxu0 0.0
      %590 = vmatpush1.msra.mxu0 0.0
      %591 = vmatprep.subr.mxu0 0.0
      %592 = vmatpush1.msra.mxu0 0.0
      %593 = vmatprep.subr.mxu0 0.0
      %594 = vmatpush1.msra.mxu0 0.0
      %595 = vmatprep.subr.mxu0 0.0
      %596 = vmatpush1.msra.mxu0 0.0
      %597 = vmatprep.subr.mxu0 0.0
      %598 = vmatpush1.msra.mxu0 0.0
      %599 = vmatprep.subr.mxu0 0.0
      %600 = vmatpush1.msra.mxu0 0.0
      %601 = vmatprep.subr.mxu0 0.0
      %602 = vmatpush1.msra.mxu0 0.0
      %603 = vmatprep.subr.mxu0 0.0
      %604 = vmatpush1.msra.mxu0 0.0
      %605 = vmatprep.mubr.f32.mxu0 %v530
      %606 = vmatmul.mubr.f32.gmra.mrb[0].mxu0 %v521
      %v607 = vpop.f32.mrb[0].mxu0
      %v608 = vadd.f32 0.0, %v607
      %v609 = vpop.f32.mrb[0].mxu0
      %610 = vmatprep.mubr.f32.mxu0 %v533
      %611 = vmatmul.mubr.f32.gmra.mrb[0].mxu0 %v523
      %v612 = vpop.f32.mrb[0].mxu0
      %v613 = vadd.f32 0.0, %v612
      %v614 = vpop.f32.mrb[0].mxu0
      %615 = vmatprep.mubr.f32.mxu0 %v536
      %616 = vmatmul.mubr.f32.gmra.mrb[0].mxu0 %v525
      %v617 = vpop.f32.mrb[0].mxu0
      %v618 = vadd.f32 0.0, %v617
      %v619 = vpop.f32.mrb[0].mxu0
      %620 = vmatprep.mubr.f32.mxu0 %v539
      %621 = vmatmul.mubr.f32.gmra.mrb[0].mxu0 %v527
      %v622 = vpop.f32.mrb[0].mxu0
      %v623 = vadd.f32 0.0, %v622
      %v624 = vpop.f32.mrb[0].mxu0
      %625 = vdwg.mxu0
      %v626 = vmax.f32 %v516, %v608
      %v627 = vmax.f32 %v517, %v613
      %v628 = vmax.f32 %v518, %v618
      %v629 = vmax.f32 %v519, %v623
      %v630 = vld [vmem:[%s2] sm:$0x1]
      %v632 = vlaneseq
      %v633 = vshrl.u32 %v632, 7
      %v634 = vsub.s32 0, %v633
      %v635 = vrot.slane %v630, %v634
      %v637 = vadd.f32 %v626, %v635
      %v638 = vadd.f32 %v627, %v635
      %v639 = vadd.f32 %v628, %v635
      %v640 = vadd.f32 %v629, %v635
      %v641 = vmax.f32 %v637, 0.0
      %v642 = vmax.f32 %v638, 0.0
      %v643 = vmax.f32 %v639, 0.0
      %v644 = vmax.f32 %v640, 0.0
      %vm645 = vcmask 130048
      %646 = vst.msk [vmem:[%s170] sm:$0xff] %vm645, %v641
      %647 = vst.msk [vmem:[%s170 + $0x8] sm:$0xff] %vm645, %v642
      %648 = vst.msk [vmem:[%s170 + $0x10] sm:$0xff] %vm645, %v643
      %vm649 = vcmask 122880
      %650 = vst.msk [vmem:[%s170 + $0x18] sm:$0x1] %vm649, %v644
      %p651 = scmp.lt.s32.totalorder %s14, 1
      %s652 = scalar_select %p651, %s14, 1
      %s653 = smul.addr %s652, 4
      %s654 = smul.addr %s653, 8
      %s655 = scalar_lea.vmem %s3, %s654
      // Predicated region
      $region33: #{net_forward.4} parent=31 // pred_check
        %p656 = pneg %p100
      $region34: #{net_forward.4} parent=31 // pred_check_branch
        %658 = sbr.rel (%p656) target = $region36
      $region35: #{net_forward.4} parent=31 // pred_region
        _
      $region36: #{net_forward.4} parent=31 // pred_fallthru
        _
    $region32: #{net_forward.4} parent=5 // pred_fallthru
      _
    %p659 = scmp.le.s32.totalorder 2, %s9
    // Predicated region
    $region37: #{net_forward.4} parent=5 // pred_check
      %p660 = pneg %p659
    $region38: #{net_forward.4} parent=5 // pred_check_branch
      %662 = sbr.rel (%p660) target = $region40
    $region39: #{net_forward.4} parent=5 // pred_region
      %s663 = ssub.s32 %s9, 2
      // Predicated region
      $region41: #{net_forward.4} parent=39 // pred_check
        %p664 = pneg %p106
      $region42: #{net_forward.4} parent=39 // pred_check_branch
        %666 = sbr.rel (%p664) target = $region44
      $region43: #{net_forward.4} parent=39 // pred_region
        %p667 = scmp.lt.s32.totalorder %s15, 1
        %s668 = scalar_select %p667, %s15, 1
        %s669 = smul.addr %s668, 4
        %s670 = smul.addr %s669, 8
        %s671 = scalar_lea.vmem %s3, %s670
      $region44: #{net_forward.4} parent=39 // pred_fallthru
        _
    $region40: #{net_forward.4} parent=5 // pred_fallthru
      _
  $region6: #{net_forward.4} parent=0 // loop_footer
    %s13 = sadd.s32 1, %s9
  $region7: #{net_forward.4} parent=0 // loop_footer_branch
    %8 = sbr.rel target = $region3
  $region8: #{net_forward.4} parent=0 // loop_exit
    _

// kernel: net_forward.5
$region0: #{net_forward.5}
  #allocation0 [shape = 'u32[]', space=smem, size = 0x4, offset = 0x4, fixed_abs, tag = 'smem constant byte address 0x4 - core index']
  #allocation1 [shape = 'u32[144,128]{1,0:T(1,128)}', space=vmem, size = 0x12000, scoped, tag = 'internal scratch']
  %s0 = inlined_call_operand.vmem [shape: f32[2,400], index: 0, kind: input, shape index: {}]
  %s1 = inlined_call_operand.vmem [shape: f32[400,128], index: 1, kind: input, shape index: {}]
  %s2 = inlined_call_operand.vmem [shape: f32[1,128], index: 2, kind: input, shape index: {}]
  %s3 = inlined_call_operand.vmem [shape: f32[128,128], index: 3, kind: input, shape index: {}]
  %s4 = inlined_call_operand.vmem [shape: f32[1,128], index: 4, kind: input, shape index: {}]
  %s5 = inlined_call_operand.vmem [shape: f32[128,128], index: 5, kind: input, shape index: {}]
  %s6 = inlined_call_operand.vmem [shape: f32[1,128], index: 6, kind: input, shape index: {}]
  %s7 = inlined_call_operand.hbm [shape: f32[2,128], index: 7, kind: output, shape index: {}]
  %s8 = sld [smem:[#allocation0]]
  $region38: #{net_forward.5} parent=0
    _
  %s10 = ssub.s32 1, %s8
  %s11 = scalar_select 0, %s10, %s8
  $region1: #{net_forward.5} parent=0
    #allocation2 [shape = 'u8[1024]{0}', space=vmem, size = 0x400, scoped, tag = 'output window, operand 0, single buffered']
    #allocation3 [shape = 's32[1]{0}', space=sflag, size = 0x4, scoped, tag = 'scoped memory for net_forward.5']
    %12 = vsyncpa [#allocation3], 0
    // Predicated region
    $region2: #{net_forward.5} parent=1 // pred_check
      _
    $region3: #{net_forward.5} parent=1 // pred_check_branch
      %14 = sbr.rel (0) target = $region5
    $region4: #{net_forward.5} parent=1 // pred_region
      _
    $region5: #{net_forward.5} parent=1 // pred_fallthru
      _
    // Predicated region
    $region6: #{net_forward.5} parent=1 // pred_check
      _
    $region7: #{net_forward.5} parent=1 // pred_check_branch
      %16 = sbr.rel (0) target = $region9
    $region8: #{net_forward.5} parent=1 // pred_region
      _
    $region9: #{net_forward.5} parent=1 // pred_fallthru
      _
    // Predicated region
    $region10: #{net_forward.5} parent=1 // pred_check
      _
    $region11: #{net_forward.5} parent=1 // pred_check_branch
      %18 = sbr.rel (0) target = $region13
    $region12: #{net_forward.5} parent=1 // pred_region
      _
    $region13: #{net_forward.5} parent=1 // pred_fallthru
      _
    // Predicated region
    $region14: #{net_forward.5} parent=1 // pred_check
      _
    $region15: #{net_forward.5} parent=1 // pred_check_branch
      %20 = sbr.rel (0) target = $region17
    $region16: #{net_forward.5} parent=1 // pred_region
      _
    $region17: #{net_forward.5} parent=1 // pred_fallthru
      _
    // Predicated region
    $region18: #{net_forward.5} parent=1 // pred_check
      _
    $region19: #{net_forward.5} parent=1 // pred_check_branch
      %22 = sbr.rel (0) target = $region21
    $region20: #{net_forward.5} parent=1 // pred_region
      _
    $region21: #{net_forward.5} parent=1 // pred_fallthru
      _
    // Predicated region
    $region22: #{net_forward.5} parent=1 // pred_check
      _
    $region23: #{net_forward.5} parent=1 // pred_check_branch
      %24 = sbr.rel (0) target = $region25
    $region24: #{net_forward.5} parent=1 // pred_region
      _
    $region25: #{net_forward.5} parent=1 // pred_fallthru
      _
    // Predicated region
    $region26: #{net_forward.5} parent=1 // pred_check
      _
    $region27: #{net_forward.5} parent=1 // pred_check_branch
      %26 = sbr.rel (0) target = $region29
    $region28: #{net_forward.5} parent=1 // pred_region
      _
    $region29: #{net_forward.5} parent=1 // pred_fallthru
      _
    %v27 = vld [vmem:[%s0] sm:$0xff]
    %v28 = vld [vmem:[%s1] sm:$0xff]
    %v29 = vld [vmem:[%s1 + $0x8] sm:$0xff]
    %v30 = vld [vmem:[%s1 + $0x10] sm:$0xff]
    %v31 = vld [vmem:[%s1 + $0x18] sm:$0xff]
    %v32 = vld [vmem:[%s1 + $0x20] sm:$0xff]
    %v33 = vld [vmem:[%s1 + $0x28] sm:$0xff]
    %v34 = vld [vmem:[%s1 + $0x30] sm:$0xff]
    %v35 = vld [vmem:[%s1 + $0x38] sm:$0xff]
    %v36 = vld [vmem:[%s1 + $0x40] sm:$0xff]
    %v37 = vld [vmem:[%s1 + $0x48] sm:$0xff]
    %v38 = vld [vmem:[%s1 + $0x50] sm:$0xff]
    %v39 = vld [vmem:[%s1 + $0x58] sm:$0xff]
    %v40 = vld [vmem:[%s1 + $0x60] sm:$0xff]
    %v41 = vld [vmem:[%s1 + $0x68] sm:$0xff]
    %v42 = vld [vmem:[%s1 + $0x70] sm:$0xff]
    %v43 = vld [vmem:[%s1 + $0x78] sm:$0xff]
    %v44 = vld [vmem:[%s1 + $0x80] sm:$0xff]
    %v45 = vld [vmem:[%s1 + $0x88] sm:$0xff]
    %v46 = vld [vmem:[%s1 + $0x90] sm:$0xff]
    %v47 = vld [vmem:[%s1 + $0x98] sm:$0xff]
    %v48 = vld [vmem:[%s1 + $0xa0] sm:$0xff]
    %v49 = vld [vmem:[%s1 + $0xa8] sm:$0xff]
    %v50 = vld [vmem:[%s1 + $0xb0] sm:$0xff]
    %v51 = vld [vmem:[%s1 + $0xb8] sm:$0xff]
    %v52 = vld [vmem:[%s1 + $0xc0] sm:$0xff]
    %v53 = vld [vmem:[%s1 + $0xc8] sm:$0xff]
    %v54 = vld [vmem:[%s1 + $0xd0] sm:$0xff]
    %v55 = vld [vmem:[%s1 + $0xd8] sm:$0xff]
    %v56 = vld [vmem:[%s1 + $0xe0] sm:$0xff]
    %v57 = vld [vmem:[%s1 + $0xe8] sm:$0xff]
    %v58 = vld [vmem:[%s1 + $0xf0] sm:$0xff]
    %v59 = vld [vmem:[%s1 + $0xf8] sm:$0xff]
    %v60 = vld [vmem:[%s1 + $0x100] sm:$0xff]
    %v61 = vld [vmem:[%s1 + $0x108] sm:$0xff]
    %v62 = vld [vmem:[%s1 + $0x110] sm:$0xff]
    %v63 = vld [vmem:[%s1 + $0x118] sm:$0xff]
    %v64 = vld [vmem:[%s1 + $0x120] sm:$0xff]
    %v65 = vld [vmem:[%s1 + $0x128] sm:$0xff]
    %v66 = vld [vmem:[%s1 + $0x130] sm:$0xff]
    %v67 = vld [vmem:[%s1 + $0x138] sm:$0xff]
    %v68 = vld [vmem:[%s1 + $0x140] sm:$0xff]
    %v69 = vld [vmem:[%s1 + $0x148] sm:$0xff]
    %v70 = vld [vmem:[%s1 + $0x150] sm:$0xff]
    %v71 = vld [vmem:[%s1 + $0x158] sm:$0xff]
    %v72 = vld [vmem:[%s1 + $0x160] sm:$0xff]
    %v73 = vld [vmem:[%s1 + $0x168] sm:$0xff]
    %v74 = vld [vmem:[%s1 + $0x170] sm:$0xff]
    %v75 = vld [vmem:[%s1 + $0x178] sm:$0xff]
    %v76 = vld [vmem:[%s1 + $0x180] sm:$0xff]
    %v77 = vld [vmem:[%s1 + $0x188] sm:$0xff]
    %v78 = vld [vmem:[%s2] sm:$0x1]
    %v80 = vlaneseq
    %v81 = vshrl.u32 %v80, 7
    %v82 = vsub.s32 0, %v81
    %v83 = vrot.slane %v78, %v82
    %v86 = vcombine.high %v27, %v27
    %v88 = vunpack.c.l.s4 1983009808
    %v89 = vunpack.c.0.s8 %v88
    %v90 = vlaneseq
    %v91 = vshrl.u32 %v90, 7
    %v92 = vsub.s32 %v89, %v91
    %v93 = vrot.slane %v27, %v92
    %v95 = vunpack.c.l.s4 1983009808
    %v96 = vunpack.c.0.s8 %v95
    %v97 = vlaneseq
    %v98 = vshrl.u32 %v97, 7
    %v99 = vsub.s32 %v96, %v98
    %v100 = vrot.slane %v86, %v99
    %v101 = vcombine.high %v93, %v93
    %v102 = vcombine.high %v100, %v100
    %vm106 = vcmask 130048
    %v107 = vsel %vm106, %v102, 0
    %109 = vmatprep.subr.mxu0 0.0
    %110 = vmatpush1.msra.mxu0 %v28
    %111 = vmatprep.subr.mxu0 0.0
    %112 = vmatpush1.msra.mxu0 %v29
    %113 = vmatprep.subr.mxu0 0.0
    %114 = vmatpush1.msra.mxu0 %v30
    %115 = vmatprep.subr.mxu0 0.0
    %116 = vmatpush1.msra.mxu0 %v31
    %117 = vmatprep.subr.mxu0 0.0
    %118 = vmatpush1.msra.mxu0 %v32
    %119 = vmatprep.subr.mxu0 0.0
    %120 = vmatpush1.msra.mxu0 %v33
    %121 = vmatprep.subr.mxu0 0.0
    %122 = vmatpush1.msra.mxu0 %v34
    %123 = vmatprep.subr.mxu0 0.0
    %124 = vmatpush1.msra.mxu0 %v35
    %125 = vmatprep.subr.mxu0 0.0
    %126 = vmatpush1.msra.mxu0 %v36
    %127 = vmatprep.subr.mxu0 0.0
    %128 = vmatpush1.msra.mxu0 %v37
    %129 = vmatprep.subr.mxu0 0.0
    %130 = vmatpush1.msra.mxu0 %v38
    %131 = vmatprep.subr.mxu0 0.0
    %132 = vmatpush1.msra.mxu0 %v39
    %133 = vmatprep.subr.mxu0 0.0
    %134 = vmatpush1.msra.mxu0 %v40
    %135 = vmatprep.subr.mxu0 0.0
    %136 = vmatpush1.msra.mxu0 %v41
    %137 = vmatprep.subr.mxu0 0.0
    %138 = vmatpush1.msra.mxu0 %v42
    %139 = vmatprep.subr.mxu0 0.0
    %140 = vmatpush1.msra.mxu0 %v43
    %141 = vmatprep.subr.mxu0 0.0
    %142 = vmatpush1.msra.mxu0 %v44
    %143 = vmatprep.subr.mxu0 0.0
    %144 = vmatpush1.msra.mxu0 %v45
    %145 = vmatprep.subr.mxu0 0.0
    %146 = vmatpush1.msra.mxu0 %v46
    %147 = vmatprep.subr.mxu0 0.0
    %148 = vmatpush1.msra.mxu0 %v47
    %149 = vmatprep.subr.mxu0 0.0
    %150 = vmatpush1.msra.mxu0 %v48
    %151 = vmatprep.subr.mxu0 0.0
    %152 = vmatpush1.msra.mxu0 %v49
    %153 = vmatprep.subr.mxu0 0.0
    %154 = vmatpush1.msra.mxu0 %v50
    %155 = vmatprep.subr.mxu0 0.0
    %156 = vmatpush1.msra.mxu0 %v51
    %157 = vmatprep.subr.mxu0 0.0
    %158 = vmatpush1.msra.mxu0 %v52
    %159 = vmatprep.subr.mxu0 0.0
    %160 = vmatpush1.msra.mxu0 %v53
    %161 = vmatprep.subr.mxu0 0.0
    %162 = vmatpush1.msra.mxu0 %v54
    %163 = vmatprep.subr.mxu0 0.0
    %164 = vmatpush1.msra.mxu0 %v55
    %165 = vmatprep.subr.mxu0 0.0
    %166 = vmatpush1.msra.mxu0 %v56
    %167 = vmatprep.subr.mxu0 0.0
    %168 = vmatpush1.msra.mxu0 %v57
    %169 = vmatprep.subr.mxu0 0.0
    %170 = vmatpush1.msra.mxu0 %v58
    %171 = vmatprep.subr.mxu0 0.0
    %172 = vmatpush1.msra.mxu0 %v59
    %173 = vmatprep.mubr.f32.mxu0 %v101
    %174 = vmatmul.mubr.f32.gmra.mrb[0].mxu0 %v93
    %v175 = vpop.f32.mrb[0].mxu0
    %v176 = vadd.f32 %v83, %v175
    %v177 = vpop.f32.mrb[0].mxu0
    %178 = vdwg.mxu0
    %179 = vmatprep.subr.mxu0 0.0
    %180 = vmatpush1.msra.mxu0 %v60
    %181 = vmatprep.subr.mxu0 0.0
    %182 = vmatpush1.msra.mxu0 %v61
    %183 = vmatprep.subr.mxu0 0.0
    %184 = vmatpush1.msra.mxu0 %v62
    %185 = vmatprep.subr.mxu0 0.0
    %186 = vmatpush1.msra.mxu0 %v63
    %187 = vmatprep.subr.mxu0 0.0
    %188 = vmatpush1.msra.mxu0 %v64
    %189 = vmatprep.subr.mxu0 0.0
    %190 = vmatpush1.msra.mxu0 %v65
    %191 = vmatprep.subr.mxu0 0.0
    %192 = vmatpush1.msra.mxu0 %v66
    %193 = vmatprep.subr.mxu0 0.0
    %194 = vmatpush1.msra.mxu0 %v67
    %195 = vmatprep.subr.mxu0 0.0
    %196 = vmatpush1.msra.mxu0 %v68
    %197 = vmatprep.subr.mxu0 0.0
    %198 = vmatpush1.msra.mxu0 %v69
    %199 = vmatprep.subr.mxu0 0.0
    %200 = vmatpush1.msra.mxu0 %v70
    %201 = vmatprep.subr.mxu0 0.0
    %202 = vmatpush1.msra.mxu0 %v71
    %203 = vmatprep.subr.mxu0 0.0
    %204 = vmatpush1.msra.mxu0 %v72
    %205 = vmatprep.subr.mxu0 0.0
    %206 = vmatpush1.msra.mxu0 %v73
    %207 = vmatprep.subr.mxu0 0.0
    %208 = vmatpush1.msra.mxu0 %v74
    %209 = vmatprep.subr.mxu0 0.0
    %210 = vmatpush1.msra.mxu0 %v75
    %211 = vmatprep.subr.mxu0 0.0
    %212 = vmatpush1.msra.mxu0 %v76
    %213 = vmatprep.subr.mxu0 0.0
    %214 = vmatpush1.msra.mxu0 %v77
    %215 = vmatprep.subr.mxu0 0.0
    %216 = vmatpush1.msra.mxu0 0.0
    %217 = vmatprep.subr.mxu0 0.0
    %218 = vmatpush1.msra.mxu0 0.0
    %219 = vmatprep.subr.mxu0 0.0
    %220 = vmatpush1.msra.mxu0 0.0
    %221 = vmatprep.subr.mxu0 0.0
    %222 = vmatpush1.msra.mxu0 0.0
    %223 = vmatprep.subr.mxu0 0.0
    %224 = vmatpush1.msra.mxu0 0.0
    %225 = vmatprep.subr.mxu0 0.0
    %226 = vmatpush1.msra.mxu0 0.0
    %227 = vmatprep.subr.mxu0 0.0
    %228 = vmatpush1.msra.mxu0 0.0
    %229 = vmatprep.subr.mxu0 0.0
    %230 = vmatpush1.msra.mxu0 0.0
    %231 = vmatprep.subr.mxu0 0.0
    %232 = vmatpush1.msra.mxu0 0.0
    %233 = vmatprep.subr.mxu0 0.0
    %234 = vmatpush1.msra.mxu0 0.0
    %235 = vmatprep.subr.mxu0 0.0
    %236 = vmatpush1.msra.mxu0 0.0
    %237 = vmatprep.subr.mxu0 0.0
    %238 = vmatpush1.msra.mxu0 0.0
    %239 = vmatprep.subr.mxu0 0.0
    %240 = vmatpush1.msra.mxu0 0.0
    %241 = vmatprep.subr.mxu0 0.0
    %242 = vmatpush1.msra.mxu0 0.0
    %243 = vmatprep.mubr.f32.mxu0 %v107
    %244 = vmatmul.mubr.f32.gmra.mrb[0].mxu0 %v100
    %v245 = vpop.f32.mrb[0].mxu0
    %v246 = vadd.f32 %v176, %v245
    %v247 = vpop.f32.mrb[0].mxu0
    %248 = vdwg.mxu0
    %v249 = vmax.f32 %v246, 0.0
    %v250 = vld [vmem:[%s3] sm:$0xff]
    %v251 = vld [vmem:[%s3 + $0x8] sm:$0xff]
    %v252 = vld [vmem:[%s3 + $0x10] sm:$0xff]
    %v253 = vld [vmem:[%s3 + $0x18] sm:$0xff]
    %v254 = vld [vmem:[%s3 + $0x20] sm:$0xff]
    %v255 = vld [vmem:[%s3 + $0x28] sm:$0xff]
    %v256 = vld [vmem:[%s3 + $0x30] sm:$0xff]
    %v257 = vld [vmem:[%s3 + $0x38] sm:$0xff]
    %v258 = vld [vmem:[%s3 + $0x40] sm:$0xff]
    %v259 = vld [vmem:[%s3 + $0x48] sm:$0xff]
    %v260 = vld [vmem:[%s3 + $0x50] sm:$0xff]
    %v261 = vld [vmem:[%s3 + $0x58] sm:$0xff]
    %v262 = vld [vmem:[%s3 + $0x60] sm:$0xff]
    %v263 = vld [vmem:[%s3 + $0x68] sm:$0xff]
    %v264 = vld [vmem:[%s3 + $0x70] sm:$0xff]
    %v265 = vld [vmem:[%s3 + $0x78] sm:$0xff]
    %v266 = vld [vmem:[%s4] sm:$0x1]
    %v268 = vlaneseq
    %v269 = vshrl.u32 %v268, 7
    %v270 = vsub.s32 0, %v269
    %v271 = vrot.slane %v266, %v270
    %273 = vmatprep.subr.mxu0 0.0
    %274 = vmatpush1.msra.mxu0 %v250
    %275 = vmatprep.subr.mxu0 0.0
    %276 = vmatpush1.msra.mxu0 %v251
    %277 = vmatprep.subr.mxu0 0.0
    %278 = vmatpush1.msra.mxu0 %v252
    %279 = vmatprep.subr.mxu0 0.0
    %280 = vmatpush1.msra.mxu0 %v253
    %281 = vmatprep.subr.mxu0 0.0
    %282 = vmatpush1.msra.mxu0 %v254
    %283 = vmatprep.subr.mxu0 0.0
    %284 = vmatpush1.msra.mxu0 %v255
    %285 = vmatprep.subr.mxu0 0.0
    %286 = vmatpush1.msra.mxu0 %v256
    %287 = vmatprep.subr.mxu0 0.0
    %288 = vmatpush1.msra.mxu0 %v257
    %289 = vmatprep.subr.mxu0 0.0
    %290 = vmatpush1.msra.mxu0 %v258
    %291 = vmatprep.subr.mxu0 0.0
    %292 = vmatpush1.msra.mxu0 %v259
    %293 = vmatprep.subr.mxu0 0.0
    %294 = vmatpush1.msra.mxu0 %v260
    %295 = vmatprep.subr.mxu0 0.0
    %296 = vmatpush1.msra.mxu0 %v261
    %297 = vmatprep.subr.mxu0 0.0
    %298 = vmatpush1.msra.mxu0 %v262
    %299 = vmatprep.subr.mxu0 0.0
    %300 = vmatpush1.msra.mxu0 %v263
    %301 = vmatprep.subr.mxu0 0.0
    %302 = vmatpush1.msra.mxu0 %v264
    %303 = vmatprep.subr.mxu0 0.0
    %304 = vmatpush1.msra.mxu0 %v265
    %305 = vmatprep.subr.mxu0 0.0
    %306 = vmatpush1.msra.mxu0 0.0
    %307 = vmatprep.subr.mxu0 0.0
    %308 = vmatpush1.msra.mxu0 0.0
    %309 = vmatprep.subr.mxu0 0.0
    %310 = vmatpush1.msra.mxu0 0.0
    %311 = vmatprep.subr.mxu0 0.0
    %312 = vmatpush1.msra.mxu0 0.0
    %313 = vmatprep.subr.mxu0 0.0
    %314 = vmatpush1.msra.mxu0 0.0
    %315 = vmatprep.subr.mxu0 0.0
    %316 = vmatpush1.msra.mxu0 0.0
    %317 = vmatprep.subr.mxu0 0.0
    %318 = vmatpush1.msra.mxu0 0.0
    %319 = vmatprep.subr.mxu0 0.0
    %320 = vmatpush1.msra.mxu0 0.0
    %321 = vmatprep.subr.mxu0 0.0
    %322 = vmatpush1.msra.mxu0 0.0
    %323 = vmatprep.subr.mxu0 0.0
    %324 = vmatpush1.msra.mxu0 0.0
    %325 = vmatprep.subr.mxu0 0.0
    %326 = vmatpush1.msra.mxu0 0.0
    %327 = vmatprep.subr.mxu0 0.0
    %328 = vmatpush1.msra.mxu0 0.0
    %329 = vmatprep.subr.mxu0 0.0
    %330 = vmatpush1.msra.mxu0 0.0
    %331 = vmatprep.subr.mxu0 0.0
    %332 = vmatpush1.msra.mxu0 0.0
    %333 = vmatprep.subr.mxu0 0.0
    %334 = vmatpush1.msra.mxu0 0.0
    %335 = vmatprep.subr.mxu0 0.0
    %336 = vmatpush1.msra.mxu0 0.0
    %337 = vmatprep.mubr.f32.mxu0 0.0
    %338 = vmatmul.mubr.f32.gmra.mrb[0].mxu0 %v249
    %v339 = vpop.f32.mrb[0].mxu0
    %v340 = vadd.f32 %v271, %v339
    %v341 = vpop.f32.mrb[0].mxu0
    %342 = vdwg.mxu0
    %v343 = vmax.f32 %v340, 0.0
    %v344 = vld [vmem:[%s5] sm:$0xff]
    %v345 = vld [vmem:[%s5 + $0x8] sm:$0xff]
    %v346 = vld [vmem:[%s5 + $0x10] sm:$0xff]
    %v347 = vld [vmem:[%s5 + $0x18] sm:$0xff]
    %v348 = vld [vmem:[%s5 + $0x20] sm:$0xff]
    %v349 = vld [vmem:[%s5 + $0x28] sm:$0xff]
    %v350 = vld [vmem:[%s5 + $0x30] sm:$0xff]
    %v351 = vld [vmem:[%s5 + $0x38] sm:$0xff]
    %v352 = vld [vmem:[%s5 + $0x40] sm:$0xff]
    %v353 = vld [vmem:[%s5 + $0x48] sm:$0xff]
    %v354 = vld [vmem:[%s5 + $0x50] sm:$0xff]
    %v355 = vld [vmem:[%s5 + $0x58] sm:$0xff]
    %v356 = vld [vmem:[%s5 + $0x60] sm:$0xff]
    %v357 = vld [vmem:[%s5 + $0x68] sm:$0xff]
    %v358 = vld [vmem:[%s5 + $0x70] sm:$0xff]
    %v359 = vld [vmem:[%s5 + $0x78] sm:$0xff]
    %v360 = vld [vmem:[%s6] sm:$0x1]
    %v362 = vlaneseq
    %v363 = vshrl.u32 %v362, 7
    %v364 = vsub.s32 0, %v363
    %v365 = vrot.slane %v360, %v364
    %367 = vmatprep.subr.mxu0 0.0
    %368 = vmatpush1.msra.mxu0 %v344
    %369 = vmatprep.subr.mxu0 0.0
    %370 = vmatpush1.msra.mxu0 %v345
    %371 = vmatprep.subr.mxu0 0.0
    %372 = vmatpush1.msra.mxu0 %v346
    %373 = vmatprep.subr.mxu0 0.0
    %374 = vmatpush1.msra.mxu0 %v347
    %375 = vmatprep.subr.mxu0 0.0
    %376 = vmatpush1.msra.mxu0 %v348
    %377 = vmatprep.subr.mxu0 0.0
    %378 = vmatpush1.msra.mxu0 %v349
    %379 = vmatprep.subr.mxu0 0.0
    %380 = vmatpush1.msra.mxu0 %v350
    %381 = vmatprep.subr.mxu0 0.0
    %382 = vmatpush1.msra.mxu0 %v351
    %383 = vmatprep.subr.mxu0 0.0
    %384 = vmatpush1.msra.mxu0 %v352
    %385 = vmatprep.subr.mxu0 0.0
    %386 = vmatpush1.msra.mxu0 %v353
    %387 = vmatprep.subr.mxu0 0.0
    %388 = vmatpush1.msra.mxu0 %v354
    %389 = vmatprep.subr.mxu0 0.0
    %390 = vmatpush1.msra.mxu0 %v355
    %391 = vmatprep.subr.mxu0 0.0
    %392 = vmatpush1.msra.mxu0 %v356
    %393 = vmatprep.subr.mxu0 0.0
    %394 = vmatpush1.msra.mxu0 %v357
    %395 = vmatprep.subr.mxu0 0.0
    %396 = vmatpush1.msra.mxu0 %v358
    %397 = vmatprep.subr.mxu0 0.0
    %398 = vmatpush1.msra.mxu0 %v359
    %399 = vmatprep.subr.mxu0 0.0
    %400 = vmatpush1.msra.mxu0 0.0
    %401 = vmatprep.subr.mxu0 0.0
    %402 = vmatpush1.msra.mxu0 0.0
    %403 = vmatprep.subr.mxu0 0.0
    %404 = vmatpush1.msra.mxu0 0.0
    %405 = vmatprep.subr.mxu0 0.0
    %406 = vmatpush1.msra.mxu0 0.0
    %407 = vmatprep.subr.mxu0 0.0
    %408 = vmatpush1.msra.mxu0 0.0
    %409 = vmatprep.subr.mxu0 0.0
    %410 = vmatpush1.msra.mxu0 0.0
    %411 = vmatprep.subr.mxu0 0.0
    %412 = vmatpush1.msra.mxu0 0.0
    %413 = vmatprep.subr.mxu0 0.0
    %414 = vmatpush1.msra.mxu0 0.0
    %415 = vmatprep.subr.mxu0 0.0
    %416 = vmatpush1.msra.mxu0 0.0
    %417 = vmatprep.subr.mxu0 0.0
    %418 = vmatpush1.msra.mxu0 0.0
    %419 = vmatprep.subr.mxu0 0.0
    %420 = vmatpush1.msra.mxu0 0.0
    %421 = vmatprep.subr.mxu0 0.0
    %422 = vmatpush1.msra.mxu0 0.0
    %423 = vmatprep.subr.mxu0 0.0
    %424 = vmatpush1.msra.mxu0 0.0
    %425 = vmatprep.subr.mxu0 0.0
    %426 = vmatpush1.msra.mxu0 0.0
    %427 = vmatprep.subr.mxu0 0.0
    %428 = vmatpush1.msra.mxu0 0.0
    %429 = vmatprep.subr.mxu0 0.0
    %430 = vmatpush1.msra.mxu0 0.0
    %431 = vmatprep.mubr.f32.mxu0 0.0
    %432 = vmatmul.mubr.f32.gmra.mrb[0].mxu0 %v343
    %v433 = vpop.f32.mrb[0].mxu0
    %v434 = vadd.f32 %v365, %v433
    %v435 = vpop.f32.mrb[0].mxu0
    %436 = vdwg.mxu0
    %437 = vst [vmem:[#allocation2] sm:$0x3] %v434
    // Predicated region
    $region30: #{net_forward.5} parent=1 // pred_check
      _
    $region31: #{net_forward.5} parent=1 // pred_check_branch
      %439 = sbr.rel (0) target = $region33
    $region32: #{net_forward.5} parent=1 // pred_region
      %s441 = ssub.s32 32, 32
      %442 = vsyncadd [#allocation3], %s441
      %s444 = sshll.u32 [#allocation2], 4
      %s445 = int_to_ptr.vmem [resolvable:$true] %s444
      %447 = dma.vmem_to_hbm [thread:$0]  %s445, 32, %s7, [#allocation3]
    $region33: #{net_forward.5} parent=1 // pred_fallthru
      _
    // Predicated region
    $region34: #{net_forward.5} parent=1 // pred_check
      _
    $region35: #{net_forward.5} parent=1 // pred_check_branch
      %449 = sbr.rel (0) target = $region37
    $region36: #{net_forward.5} parent=1 // pred_region
      %450 = dma.done [#allocation3], 32
    $region37: #{net_forward.5} parent=1 // pred_fallthru
      _
    %451 = vsyncpa [#allocation3], 1

</llo_original>
